<compile_context>
chip_gen: v5e
topology: v5e:2x2
jax: 0.10.0
libtpu: 0.0.40
codegen_flags: <defaults>
</compile_context>

<pallas_src>
import functools
import math

import jax
import jax.numpy as jnp
from jax.experimental import pallas as pl
from jax.experimental.pallas import tpu as pltpu

_VMEM_LIMIT = 48 * 1024 * 1024  # below v7x's 64 MiB per-TC VMEM


# ----------------------------------------------------------------------------
# helpers
# ----------------------------------------------------------------------------
def _seq_tile(s, target=256):
    """Largest tile <= target that exactly divides s (multiple of 8), else s."""
    if s <= target:
        return s
    t = (target // 8) * 8
    while t >= 8:
        if s % t == 0:
            return t
        t -= 8
    return s


def _split_heads_weight(w, num_heads):
    # (C_in, C_out) -> (H, C_in, D)
    c_in, c_out = w.shape
    d = c_out // num_heads
    return w.reshape(c_in, num_heads, d).transpose(1, 0, 2)


def _split_heads_bias(b, num_heads):
    # (1, C_out) -> (H, 1, D)
    c_out = b.shape[-1]
    d = c_out // num_heads
    return b.reshape(num_heads, 1, d)


# ----------------------------------------------------------------------------
# kernels
# ----------------------------------------------------------------------------
def _merge_qkv_kernel(hid_ref, pose_ref, wm_ref, bm_ref,
                      wq_ref, bq_ref, wk_ref, bk_ref, wv_ref, bv_ref,
                      q_ref, k_ref, v_ref, *, alpha, num_heads):
    """Fused (hidden+pose) merge  +  Q/K/V projections, head-major output."""
    x = hid_ref[0]                                  # (ts, C) native dtype
    h = x + pose_ref[0]
    merged = jnp.dot(h, wm_ref[...], preferred_element_type=jnp.float32)
    merged = merged + bm_ref[...].astype(jnp.float32)
    qkv_in = (merged * alpha + x.astype(jnp.float32)).astype(x.dtype)
    for hd in range(num_heads):
        q_ref[0, hd] = (jnp.dot(qkv_in, wq_ref[hd],
                                preferred_element_type=jnp.float32)
                        + bq_ref[hd].astype(jnp.float32)).astype(q_ref.dtype)
        k_ref[0, hd] = (jnp.dot(qkv_in, wk_ref[hd],
                                preferred_element_type=jnp.float32)
                        + bk_ref[hd].astype(jnp.float32)).astype(k_ref.dtype)
        v_ref[0, hd] = (jnp.dot(qkv_in, wv_ref[hd],
                                preferred_element_type=jnp.float32)
                        + bv_ref[hd].astype(jnp.float32)).astype(v_ref.dtype)


def _merge_kernel(x_ref, p_ref, w_ref, b_ref, o_ref, *, alpha):
    """Standalone pose merge (non self-attention conditioning paths)."""
    x = x_ref[0]
    h = x + p_ref[0]
    y = jnp.dot(h, w_ref[...], preferred_element_type=jnp.float32)
    y = y + b_ref[...].astype(jnp.float32)
    o_ref[0] = (y * alpha + x.astype(jnp.float32)).astype(o_ref.dtype)


def _proj_heads_kernel(*refs, num_outputs, num_heads):
    """Project one source into `num_outputs` head-major (B,H,S,D) tensors."""
    x = refs[0][0]                                  # (ts, C)
    for j in range(num_outputs):
        w_ref = refs[1 + 2 * j]
        b_ref = refs[2 + 2 * j]
        o_ref = refs[1 + 2 * num_outputs + j]
        for hd in range(num_heads):
            o_ref[0, hd] = (jnp.dot(x, w_ref[hd],
                                    preferred_element_type=jnp.float32)
                            + b_ref[hd].astype(jnp.float32)).astype(o_ref.dtype)


def _flash_attn_kernel(q_ref, k_ref, v_ref, o_ref, m_sc, l_sc, acc_sc):
    """KV-blocked online-softmax attention. Scale is pre-folded into q."""
    ki = pl.program_id(3)

    @pl.when(ki == 0)
    def _():
        m_sc[...] = jnp.full(m_sc.shape, -jnp.inf, m_sc.dtype)
        l_sc[...] = jnp.zeros(l_sc.shape, l_sc.dtype)
        acc_sc[...] = jnp.zeros(acc_sc.shape, acc_sc.dtype)

    q = q_ref[0, 0]                                 # (tq, D) native dtype
    k = k_ref[0, 0]                                 # (tk, D)
    v = v_ref[0, 0]                                 # (tk, D)
    # q @ k^T without materializing a transpose: contract last dim of both.
    s = jax.lax.dot_general(q, k, (((1,), (1,)), ((), ())),
                            preferred_element_type=jnp.float32)  # (tq, tk)
    m_prev = m_sc[...]
    m_new = jnp.maximum(m_prev, jnp.max(s, axis=-1, keepdims=True))
    corr = jnp.exp(m_prev - m_new)
    p = jnp.exp(s - m_new)
    l_sc[...] = corr * l_sc[...] + jnp.sum(p, axis=-1, keepdims=True)
    acc_sc[...] = corr * acc_sc[...] + jnp.dot(
        p.astype(v.dtype), v, preferred_element_type=jnp.float32)
    m_sc[...] = m_new

    @pl.when(ki == pl.num_programs(3) - 1)
    def _():
        o_ref[0, 0] = (acc_sc[...] *
                       pl.reciprocal(l_sc[...], approx=True)).astype(o_ref.dtype)


def _out_proj_kernel(a_ref, w_ref, b_ref, res_ref, o_ref, *,
                     inv_rescale, residual, num_heads):
    """Head-merge + to_out[0] linear + residual + 1/rescale, fused."""
    ts = a_ref.shape[2]
    c_out = w_ref.shape[2]
    acc = jnp.zeros((ts, c_out), jnp.float32)
    for hd in range(num_heads):
        acc = acc + jnp.dot(a_ref[0, hd], w_ref[hd],
                            preferred_element_type=jnp.float32)
    y = acc + b_ref[...].astype(jnp.float32)
    if residual:
        y = y + res_ref[0].astype(jnp.float32)
    o_ref[0] = (y * inv_rescale).astype(o_ref.dtype)


# ----------------------------------------------------------------------------
# pallas_call wrappers
# ----------------------------------------------------------------------------
def _merge_qkv(hidden, pose, wm, bm, wq_h, bq_h, wk_h, bk_h, wv_h, bv_h,
               alpha, num_heads):
    B, S, C = hidden.shape
    D = wq_h.shape[-1]
    ts = _seq_tile(S)
    xspec = pl.BlockSpec((1, ts, C), lambda b, si: (b, si, 0))
    wspec_h = pl.BlockSpec((num_heads, C, D), lambda b, si: (0, 0, 0))
    bspec_h = pl.BlockSpec((num_heads, 1, D), lambda b, si: (0, 0, 0))
    ospec = pl.BlockSpec((1, num_heads, ts, D), lambda b, si: (b, 0, si, 0))
    q4, k4, v4 = pl.pallas_call(
        functools.partial(_merge_qkv_kernel, alpha=float(alpha),
                          num_heads=num_heads),
        out_shape=[jax.ShapeDtypeStruct((B, num_heads, S, D), hidden.dtype)] * 3,
        grid=(B, S // ts),
        in_specs=[xspec, xspec,
                  pl.BlockSpec((C, C), lambda b, si: (0, 0)),
                  pl.BlockSpec((1, C), lambda b, si: (0, 0)),
                  wspec_h, bspec_h, wspec_h, bspec_h, wspec_h, bspec_h],
        out_specs=[ospec, ospec, ospec],
        compiler_params=pltpu.CompilerParams(
            dimension_semantics=("parallel", "parallel"),
            vmem_limit_bytes=_VMEM_LIMIT),
    )(hidden, pose, wm, bm, wq_h, bq_h, wk_h, bk_h, wv_h, bv_h)
    return q4, k4, v4


def _pose_merge(x, pose, w, b, alpha):
    B, S, C = x.shape
    ts = _seq_tile(S)
    return pl.pallas_call(
        functools.partial(_merge_kernel, alpha=float(alpha)),
        out_shape=jax.ShapeDtypeStruct((B, S, C), x.dtype),
        grid=(B, S // ts),
        in_specs=[pl.BlockSpec((1, ts, C), lambda b, si: (b, si, 0)),
                  pl.BlockSpec((1, ts, C), lambda b, si: (b, si, 0)),
                  pl.BlockSpec((C, C), lambda b, si: (0, 0)),
                  pl.BlockSpec((1, C), lambda b, si: (0, 0))],
        out_specs=pl.BlockSpec((1, ts, C), lambda b, si: (b, si, 0)),
        compiler_params=pltpu.CompilerParams(
            dimension_semantics=("parallel", "parallel"),
            vmem_limit_bytes=_VMEM_LIMIT),
    )(x, pose, w, b)


def _proj_heads(x, weight_bias_pairs, num_heads):
    B, S, C = x.shape
    D = weight_bias_pairs[0][0].shape[-1]
    ts = _seq_tile(S)
    n_out = len(weight_bias_pairs)
    in_specs = [pl.BlockSpec((1, ts, C), lambda b, si: (b, si, 0))]
    args = [x]
    for w_h, b_h in weight_bias_pairs:
        in_specs.append(pl.BlockSpec((num_heads, C, D), lambda b, si: (0, 0, 0)))
        in_specs.append(pl.BlockSpec((num_heads, 1, D), lambda b, si: (0, 0, 0)))
        args.extend([w_h, b_h])
    ospec = pl.BlockSpec((1, num_heads, ts, D), lambda b, si: (b, 0, si, 0))
    outs = pl.pallas_call(
        functools.partial(_proj_heads_kernel, num_outputs=n_out,
                          num_heads=num_heads),
        out_shape=[jax.ShapeDtypeStruct((B, num_heads, S, D), x.dtype)] * n_out,
        grid=(B, S // ts),
        in_specs=in_specs,
        out_specs=[ospec] * n_out,
        compiler_params=pltpu.CompilerParams(
            dimension_semantics=("parallel", "parallel"),
            vmem_limit_bytes=_VMEM_LIMIT),
    )(*args)
    return tuple(outs)


def _flash_attention(q4, k4, v4):
    B, H, Sq, D = q4.shape
    Skv = k4.shape[2]
    tq = _seq_tile(Sq)
    tk = _seq_tile(Skv)
    return pl.pallas_call(
        _flash_attn_kernel,
        out_shape=jax.ShapeDtypeStruct((B, H, Sq, D), q4.dtype),
        grid=(B, H, Sq // tq, Skv // tk),
        in_specs=[
            pl.BlockSpec((1, 1, tq, D), lambda b, h, qi, ki: (b, h, qi, 0)),
            pl.BlockSpec((1, 1, tk, D), lambda b, h, qi, ki: (b, h, ki, 0)),
            pl.BlockSpec((1, 1, tk, D), lambda b, h, qi, ki: (b, h, ki, 0)),
        ],
        out_specs=pl.BlockSpec((1, 1, tq, D), lambda b, h, qi, ki: (b, h, qi, 0)),
        scratch_shapes=[pltpu.VMEM((tq, 1), jnp.float32),
                        pltpu.VMEM((tq, 1), jnp.float32),
                        pltpu.VMEM((tq, D), jnp.float32)],
        compiler_params=pltpu.CompilerParams(
            dimension_semantics=("parallel", "parallel", "parallel", "arbitrary"),
            vmem_limit_bytes=_VMEM_LIMIT),
    )(q4, k4, v4)


def _out_projection(attn4, w_out_h, b_out, residual, rescale_output_factor,
                    use_residual, num_heads):
    B, H, S, D = attn4.shape
    C = w_out_h.shape[-1]
    ts = _seq_tile(S)
    return pl.pallas_call(
        functools.partial(_out_proj_kernel,
                          inv_rescale=1.0 / float(rescale_output_factor),
                          residual=bool(use_residual), num_heads=num_heads),
        out_shape=jax.ShapeDtypeStruct((B, S, C), residual.dtype),
        grid=(B, S // ts),
        in_specs=[pl.BlockSpec((1, H, ts, D), lambda b, si: (b, 0, si, 0)),
                  pl.BlockSpec((H, D, C), lambda b, si: (0, 0, 0)),
                  pl.BlockSpec((1, C), lambda b, si: (0, 0)),
                  pl.BlockSpec((1, ts, C), lambda b, si: (b, si, 0))],
        out_specs=pl.BlockSpec((1, ts, C), lambda b, si: (b, si, 0)),
        compiler_params=pltpu.CompilerParams(
            dimension_semantics=("parallel", "parallel"),
            vmem_limit_bytes=_VMEM_LIMIT),
    )(attn4, w_out_h, b_out, residual)


# ----------------------------------------------------------------------------
# Full forward
# ----------------------------------------------------------------------------
def pose_adaptor_attention(hidden_states, pose_feature, params, *, num_heads,
                           query_condition=True, key_value_condition=True,
                           encoder_hidden_states=None, pose_scale=1.0,
                           residual_connection=True, rescale_output_factor=1.0):
    assert hidden_states.ndim == 3 and pose_feature.ndim == 3
    if query_condition and key_value_condition:
        assert encoder_hidden_states is None

    C = params["to_q_w"].shape[1]
    head_dim = C // num_heads
    attn_scale = 1.0 / math.sqrt(head_dim)        # diffusers attn.scale

    # Fold attention scale into the query projection (exact, zero kernel cost).
    wq_h = _split_heads_weight(params["to_q_w"] * attn_scale, num_heads)
    bq_h = _split_heads_bias(params["to_q_b"] * attn_scale, num_heads)
    wk_h = _split_heads_weight(params["to_k_w"], num_heads)
    bk_h = _split_heads_bias(params["to_k_b"], num_heads)
    wv_h = _split_heads_weight(params["to_v_w"], num_heads)
    bv_h = _split_heads_bias(params["to_v_b"], num_heads)
    wo_h = params["to_out_w"].reshape(num_heads, head_dim, C)

    if query_condition and key_value_condition:
        # hero path: self-attention with pose merge, fully fused merge + QKV
        q4, k4, v4 = _merge_qkv(hidden_states, pose_feature,
                                params["merge_w"], params["merge_b"],
                                wq_h, bq_h, wk_h, bk_h, wv_h, bv_h,
                                pose_scale, num_heads)
    else:
        if encoder_hidden_states is None:
            encoder_hidden_states = hidden_states
        if query_condition:
            q_src = _pose_merge(hidden_states, pose_feature,
                                params["merge_w"], params["merge_b"], pose_scale)
            kv_src = encoder_hidden_states
        else:
            kv_src = _pose_merge(encoder_hidden_states, pose_feature,
                                 params["merge_w"], params["merge_b"], pose_scale)
            q_src = hidden_states
        (q4,) = _proj_heads(q_src, [(wq_h, bq_h)], num_heads)
        k4, v4 = _proj_heads(kv_src, [(wk_h, bk_h), (wv_h, bv_h)], num_heads)

    # TODO(synk): attention_mask (attn_bias) path not implemented (None assumed).
    attn4 = _flash_attention(q4, k4, v4)

    # to_out[0] linear + head merge + residual + 1/rescale (to_out[1] dropout
    # is identity in eval mode).
    return _out_projection(attn4, wo_h, params["to_out_b"], hidden_states,
                           rescale_output_factor, residual_connection,
                           num_heads)


# ----------------------------------------------------------------------------
# Pure-JAX reference for verification
# ----------------------------------------------------------------------------
def _reference(hidden_states, pose_feature, params, *, num_heads, pose_scale,
               residual_connection, rescale_output_factor):
    merged = (hidden_states + pose_feature) @ params["merge_w"] + params["merge_b"]
    q_in = merged * pose_scale + hidden_states
    kv_in = q_in
    query = q_in @ params["to_q_w"] + params["to_q_b"]
    key = kv_in @ params["to_k_w"] + params["to_k_b"]
    value = kv_in @ params["to_v_w"] + params["to_v_b"]
    B, S, C = query.shape
    D = C // num_heads
    q = query.reshape(B, S, num_heads, D).transpose(0, 2, 1, 3)
    k = key.reshape(B, S, num_heads, D).transpose(0, 2, 1, 3)
    v = value.reshape(B, S, num_heads, D).transpose(0, 2, 1, 3)
    s = jnp.einsum("bhqd,bhkd->bhqk", q, k) / math.sqrt(D)
    p = jax.nn.softmax(s, axis=-1)
    o = jnp.einsum("bhqk,bhkd->bhqd", p, v)
    o = o.transpose(0, 2, 1, 3).reshape(B, S, C)
    o = o @ params["to_out_w"] + params["to_out_b"]
    if residual_connection:
        o = o + hidden_states
    return o / rescale_output_factor


# ----------------------------------------------------------------------------
if __name__ == "__main__":
    B, S, C, H = 2, 16, 32, 4  # batch, seq, hidden_size (== pose_feature_dim), heads
    key = jax.random.PRNGKey(0)
    ks = jax.random.split(key, 12)

    hidden_states = jax.random.normal(ks[0], (B, S, C), jnp.float32)
    pose_feature = jax.random.normal(ks[1], (B, S, C), jnp.float32)

    # NOTE: the PyTorch __init__ zero-inits qkv_merge; we use small deterministic
    # random values instead so the merge kernel is actually exercised.
    def w(k):
        return jax.random.normal(k, (C, C), jnp.float32) * 0.05

    def b(k):
        return jax.random.normal(k, (1, C), jnp.float32) * 0.05

    params = {
        "merge_w": w(ks[2]), "merge_b": b(ks[3]),
        "to_q_w": w(ks[4]), "to_q_b": b(ks[5]),
        "to_k_w": w(ks[6]), "to_k_b": b(ks[7]),
        "to_v_w": w(ks[8]), "to_v_b": b(ks[9]),
        "to_out_w": w(ks[10]), "to_out_b": b(ks[11]),
    }

    out = pose_adaptor_attention(
        hidden_states, pose_feature, params, num_heads=H,
        query_condition=True, key_value_condition=True,
        pose_scale=1.0, residual_connection=True, rescale_output_factor=1.0)
    out = jax.block_until_ready(out)

    ref = _reference(hidden_states, pose_feature, params, num_heads=H,
                     pose_scale=1.0, residual_connection=True,
                     rescale_output_factor=1.0)
    assert out.shape == (B, S, C)
    # tolerance allows for the approx (EUP) reciprocal in the softmax denom
    assert jnp.allclose(out, ref, atol=2e-3, rtol=2e-3), "mismatch vs reference"

    print("KERNEL_OK")
</pallas_src>

<mosaic_0001>
module attributes {stable_mosaic.version = 11 : i64} {
  func.func @_merge_qkv_kernel(%arg0: i32, %arg1: i32, %arg2: memref<1x16x32xf32, #tpu.memory_space<vmem>>, %arg3: memref<1x16x32xf32, #tpu.memory_space<vmem>>, %arg4: memref<32x32xf32, #tpu.memory_space<vmem>>, %arg5: memref<1x32xf32, #tpu.memory_space<vmem>>, %arg6: memref<4x32x8xf32, #tpu.memory_space<vmem>>, %arg7: memref<4x1x8xf32, #tpu.memory_space<vmem>>, %arg8: memref<4x32x8xf32, #tpu.memory_space<vmem>>, %arg9: memref<4x1x8xf32, #tpu.memory_space<vmem>>, %arg10: memref<4x32x8xf32, #tpu.memory_space<vmem>>, %arg11: memref<4x1x8xf32, #tpu.memory_space<vmem>>, %arg12: memref<1x4x16x8xf32, #tpu.memory_space<vmem>>, %arg13: memref<1x4x16x8xf32, #tpu.memory_space<vmem>>, %arg14: memref<1x4x16x8xf32, #tpu.memory_space<vmem>>) attributes {dimension_semantics = [#tpu.dimension_semantics<parallel>, #tpu.dimension_semantics<parallel>], iteration_bounds = array<i64: 2, 1>, scalar_prefetch = 0 : i64, scratch_operands = 0 : i64, tpu.core_type = #tpu.core_type<tc>, window_params = [{transform_indices = @transform_0, window_bounds = array<i64: 1, 16, 32>}, {transform_indices = @transform_1, window_bounds = array<i64: 1, 16, 32>}, {pipeline_mode = #tpu.pipeline_mode<synchronous>, transform_indices = @transform_2, window_bounds = array<i64: 32, 32>}, {pipeline_mode = #tpu.pipeline_mode<synchronous>, transform_indices = @transform_3, window_bounds = array<i64: 1, 32>}, {pipeline_mode = #tpu.pipeline_mode<synchronous>, transform_indices = @transform_4, window_bounds = array<i64: 4, 32, 8>}, {pipeline_mode = #tpu.pipeline_mode<synchronous>, transform_indices = @transform_5, window_bounds = array<i64: 4, 1, 8>}, {pipeline_mode = #tpu.pipeline_mode<synchronous>, transform_indices = @transform_6, window_bounds = array<i64: 4, 32, 8>}, {pipeline_mode = #tpu.pipeline_mode<synchronous>, transform_indices = @transform_7, window_bounds = array<i64: 4, 1, 8>}, {pipeline_mode = #tpu.pipeline_mode<synchronous>, transform_indices = @transform_8, window_bounds = array<i64: 4, 32, 8>}, {pipeline_mode = #tpu.pipeline_mode<synchronous>, transform_indices = @transform_9, window_bounds = array<i64: 4, 1, 8>}, {transform_indices = @transform_10, window_bounds = array<i64: 1, 4, 16, 8>}, {transform_indices = @transform_11, window_bounds = array<i64: 1, 4, 16, 8>}, {transform_indices = @transform_12, window_bounds = array<i64: 1, 4, 16, 8>}]} {
    %c0 = arith.constant 0 : index
    %c0_0 = arith.constant 0 : index
    %c0_1 = arith.constant 0 : index
    %0 = vector.load %arg2[%c0, %c0_0, %c0_1] : memref<1x16x32xf32, #tpu.memory_space<vmem>>, vector<1x16x32xf32>
    %1 = vector.shape_cast %0 : vector<1x16x32xf32> to vector<16x32xf32>
    %c0_2 = arith.constant 0 : index
    %c0_3 = arith.constant 0 : index
    %c0_4 = arith.constant 0 : index
    %2 = vector.load %arg3[%c0_2, %c0_3, %c0_4] : memref<1x16x32xf32, #tpu.memory_space<vmem>>, vector<1x16x32xf32>
    %3 = vector.shape_cast %2 : vector<1x16x32xf32> to vector<16x32xf32>
    %4 = arith.addf %1, %3 : vector<16x32xf32>
    %c0_5 = arith.constant 0 : index
    %c0_6 = arith.constant 0 : index
    %5 = vector.load %arg4[%c0_5, %c0_6] : memref<32x32xf32, #tpu.memory_space<vmem>>, vector<32x32xf32>
    %cst = arith.constant dense<0.000000e+00> : vector<16x32xf32>
    %6 = tpu.matmul %4, %5, %cst {dimension_numbers = #tpu.dot_dimension_numbers<[1], [0], [0], [1], [0, 0, 1, 1], [], []>} : vector<16x32xf32>, vector<32x32xf32>, vector<16x32xf32> -> vector<16x32xf32>
    %c0_7 = arith.constant 0 : index
    %c0_8 = arith.constant 0 : index
    %7 = vector.load %arg5[%c0_7, %c0_8] : memref<1x32xf32, #tpu.memory_space<vmem>>, vector<1x32xf32>
    %8 = vector.broadcast %7 : vector<1x32xf32> to vector<16x32xf32>
    %9 = arith.addf %6, %8 : vector<16x32xf32>
    %cst_9 = arith.constant 1.000000e+00 : f32
    %10 = vector.broadcast %cst_9 : f32 to vector<16x32xf32>
    %11 = arith.mulf %9, %10 : vector<16x32xf32>
    %12 = arith.addf %11, %1 : vector<16x32xf32>
    %c0_10 = arith.constant 0 : index
    %c0_11 = arith.constant 0 : index
    %c0_12 = arith.constant 0 : index
    %13 = vector.load %arg6[%c0_10, %c0_11, %c0_12] : memref<4x32x8xf32, #tpu.memory_space<vmem>>, vector<1x32x8xf32>
    %14 = vector.shape_cast %13 : vector<1x32x8xf32> to vector<32x8xf32>
    %cst_13 = arith.constant dense<0.000000e+00> : vector<16x8xf32>
    %15 = tpu.matmul %12, %14, %cst_13 {dimension_numbers = #tpu.dot_dimension_numbers<[1], [0], [0], [1], [0, 0, 1, 1], [], []>} : vector<16x32xf32>, vector<32x8xf32>, vector<16x8xf32> -> vector<16x8xf32>
    %c0_14 = arith.constant 0 : index
    %c0_15 = arith.constant 0 : index
    %c0_16 = arith.constant 0 : index
    %16 = vector.load %arg7[%c0_14, %c0_15, %c0_16] : memref<4x1x8xf32, #tpu.memory_space<vmem>>, vector<1x1x8xf32>
    %17 = vector.shape_cast %16 : vector<1x1x8xf32> to vector<1x8xf32>
    %18 = vector.broadcast %17 : vector<1x8xf32> to vector<16x8xf32>
    %19 = arith.addf %15, %18 : vector<16x8xf32>
    %c0_17 = arith.constant 0 : index
    %c0_18 = arith.constant 0 : index
    %c0_19 = arith.constant 0 : index
    %c0_20 = arith.constant 0 : index
    %20 = vector.load %arg12[%c0_17, %c0_18, %c0_19, %c0_20] : memref<1x4x16x8xf32, #tpu.memory_space<vmem>>, vector<1x1x16x8xf32>
    %21 = vector.shape_cast %20 : vector<1x1x16x8xf32> to vector<16x8xf32>
    %22 = vector.shape_cast %19 : vector<16x8xf32> to vector<1x1x16x8xf32>
    tpu.vector_store %arg12[%c0_17, %c0_18, %c0_19, %c0_20], %22 {strides = array<i32>} : memref<1x4x16x8xf32, #tpu.memory_space<vmem>>, vector<1x1x16x8xf32>,
    %c0_21 = arith.constant 0 : index
    %c0_22 = arith.constant 0 : index
    %c0_23 = arith.constant 0 : index
    %23 = vector.load %arg8[%c0_21, %c0_22, %c0_23] : memref<4x32x8xf32, #tpu.memory_space<vmem>>, vector<1x32x8xf32>
    %24 = vector.shape_cast %23 : vector<1x32x8xf32> to vector<32x8xf32>
    %cst_24 = arith.constant dense<0.000000e+00> : vector<16x8xf32>
    %25 = tpu.matmul %12, %24, %cst_24 {dimension_numbers = #tpu.dot_dimension_numbers<[1], [0], [0], [1], [0, 0, 1, 1], [], []>} : vector<16x32xf32>, vector<32x8xf32>, vector<16x8xf32> -> vector<16x8xf32>
    %c0_25 = arith.constant 0 : index
    %c0_26 = arith.constant 0 : index
    %c0_27 = arith.constant 0 : index
    %26 = vector.load %arg9[%c0_25, %c0_26, %c0_27] : memref<4x1x8xf32, #tpu.memory_space<vmem>>, vector<1x1x8xf32>
    %27 = vector.shape_cast %26 : vector<1x1x8xf32> to vector<1x8xf32>
    %28 = vector.broadcast %27 : vector<1x8xf32> to vector<16x8xf32>
    %29 = arith.addf %25, %28 : vector<16x8xf32>
    %c0_28 = arith.constant 0 : index
    %c0_29 = arith.constant 0 : index
    %c0_30 = arith.constant 0 : index
    %c0_31 = arith.constant 0 : index
    %30 = vector.load %arg13[%c0_28, %c0_29, %c0_30, %c0_31] : memref<1x4x16x8xf32, #tpu.memory_space<vmem>>, vector<1x1x16x8xf32>
    %31 = vector.shape_cast %30 : vector<1x1x16x8xf32> to vector<16x8xf32>
    %32 = vector.shape_cast %29 : vector<16x8xf32> to vector<1x1x16x8xf32>
    tpu.vector_store %arg13[%c0_28, %c0_29, %c0_30, %c0_31], %32 {strides = array<i32>} : memref<1x4x16x8xf32, #tpu.memory_space<vmem>>, vector<1x1x16x8xf32>,
    %c0_32 = arith.constant 0 : index
    %c0_33 = arith.constant 0 : index
    %c0_34 = arith.constant 0 : index
    %33 = vector.load %arg10[%c0_32, %c0_33, %c0_34] : memref<4x32x8xf32, #tpu.memory_space<vmem>>, vector<1x32x8xf32>
    %34 = vector.shape_cast %33 : vector<1x32x8xf32> to vector<32x8xf32>
    %cst_35 = arith.constant dense<0.000000e+00> : vector<16x8xf32>
    %35 = tpu.matmul %12, %34, %cst_35 {dimension_numbers = #tpu.dot_dimension_numbers<[1], [0], [0], [1], [0, 0, 1, 1], [], []>} : vector<16x32xf32>, vector<32x8xf32>, vector<16x8xf32> -> vector<16x8xf32>
    %c0_36 = arith.constant 0 : index
    %c0_37 = arith.constant 0 : index
    %c0_38 = arith.constant 0 : index
    %36 = vector.load %arg11[%c0_36, %c0_37, %c0_38] : memref<4x1x8xf32, #tpu.memory_space<vmem>>, vector<1x1x8xf32>
    %37 = vector.shape_cast %36 : vector<1x1x8xf32> to vector<1x8xf32>
    %38 = vector.broadcast %37 : vector<1x8xf32> to vector<16x8xf32>
    %39 = arith.addf %35, %38 : vector<16x8xf32>
    %c0_39 = arith.constant 0 : index
    %c0_40 = arith.constant 0 : index
    %c0_41 = arith.constant 0 : index
    %c0_42 = arith.constant 0 : index
    %40 = vector.load %arg14[%c0_39, %c0_40, %c0_41, %c0_42] : memref<1x4x16x8xf32, #tpu.memory_space<vmem>>, vector<1x1x16x8xf32>
    %41 = vector.shape_cast %40 : vector<1x1x16x8xf32> to vector<16x8xf32>
    %42 = vector.shape_cast %39 : vector<16x8xf32> to vector<1x1x16x8xf32>
    tpu.vector_store %arg14[%c0_39, %c0_40, %c0_41, %c0_42], %42 {strides = array<i32>} : memref<1x4x16x8xf32, #tpu.memory_space<vmem>>, vector<1x1x16x8xf32>,
    %c1 = arith.constant 1 : index
    %c0_43 = arith.constant 0 : index
    %c0_44 = arith.constant 0 : index
    %43 = vector.load %arg6[%c1, %c0_43, %c0_44] : memref<4x32x8xf32, #tpu.memory_space<vmem>>, vector<1x32x8xf32>
    %44 = vector.shape_cast %43 : vector<1x32x8xf32> to vector<32x8xf32>
    %cst_45 = arith.constant dense<0.000000e+00> : vector<16x8xf32>
    %45 = tpu.matmul %12, %44, %cst_45 {dimension_numbers = #tpu.dot_dimension_numbers<[1], [0], [0], [1], [0, 0, 1, 1], [], []>} : vector<16x32xf32>, vector<32x8xf32>, vector<16x8xf32> -> vector<16x8xf32>
    %c1_46 = arith.constant 1 : index
    %c0_47 = arith.constant 0 : index
    %c0_48 = arith.constant 0 : index
    %46 = vector.load %arg7[%c1_46, %c0_47, %c0_48] : memref<4x1x8xf32, #tpu.memory_space<vmem>>, vector<1x1x8xf32>
    %47 = vector.shape_cast %46 : vector<1x1x8xf32> to vector<1x8xf32>
    %48 = vector.broadcast %47 : vector<1x8xf32> to vector<16x8xf32>
    %49 = arith.addf %45, %48 : vector<16x8xf32>
    %c0_49 = arith.constant 0 : index
    %c1_50 = arith.constant 1 : index
    %c0_51 = arith.constant 0 : index
    %c0_52 = arith.constant 0 : index
    %50 = vector.load %arg12[%c0_49, %c1_50, %c0_51, %c0_52] : memref<1x4x16x8xf32, #tpu.memory_space<vmem>>, vector<1x1x16x8xf32>
    %51 = vector.shape_cast %50 : vector<1x1x16x8xf32> to vector<16x8xf32>
    %52 = vector.shape_cast %49 : vector<16x8xf32> to vector<1x1x16x8xf32>
    tpu.vector_store %arg12[%c0_49, %c1_50, %c0_51, %c0_52], %52 {strides = array<i32>} : memref<1x4x16x8xf32, #tpu.memory_space<vmem>>, vector<1x1x16x8xf32>,
    %c1_53 = arith.constant 1 : index
    %c0_54 = arith.constant 0 : index
    %c0_55 = arith.constant 0 : index
    %53 = vector.load %arg8[%c1_53, %c0_54, %c0_55] : memref<4x32x8xf32, #tpu.memory_space<vmem>>, vector<1x32x8xf32>
    %54 = vector.shape_cast %53 : vector<1x32x8xf32> to vector<32x8xf32>
    %cst_56 = arith.constant dense<0.000000e+00> : vector<16x8xf32>
    %55 = tpu.matmul %12, %54, %cst_56 {dimension_numbers = #tpu.dot_dimension_numbers<[1], [0], [0], [1], [0, 0, 1, 1], [], []>} : vector<16x32xf32>, vector<32x8xf32>, vector<16x8xf32> -> vector<16x8xf32>
    %c1_57 = arith.constant 1 : index
    %c0_58 = arith.constant 0 : index
    %c0_59 = arith.constant 0 : index
    %56 = vector.load %arg9[%c1_57, %c0_58, %c0_59] : memref<4x1x8xf32, #tpu.memory_space<vmem>>, vector<1x1x8xf32>
    %57 = vector.shape_cast %56 : vector<1x1x8xf32> to vector<1x8xf32>
    %58 = vector.broadcast %57 : vector<1x8xf32> to vector<16x8xf32>
    %59 = arith.addf %55, %58 : vector<16x8xf32>
    %c0_60 = arith.constant 0 : index
    %c1_61 = arith.constant 1 : index
    %c0_62 = arith.constant 0 : index
    %c0_63 = arith.constant 0 : index
    %60 = vector.load %arg13[%c0_60, %c1_61, %c0_62, %c0_63] : memref<1x4x16x8xf32, #tpu.memory_space<vmem>>, vector<1x1x16x8xf32>
    %61 = vector.shape_cast %60 : vector<1x1x16x8xf32> to vector<16x8xf32>
    %62 = vector.shape_cast %59 : vector<16x8xf32> to vector<1x1x16x8xf32>
    tpu.vector_store %arg13[%c0_60, %c1_61, %c0_62, %c0_63], %62 {strides = array<i32>} : memref<1x4x16x8xf32, #tpu.memory_space<vmem>>, vector<1x1x16x8xf32>,
    %c1_64 = arith.constant 1 : index
    %c0_65 = arith.constant 0 : index
    %c0_66 = arith.constant 0 : index
    %63 = vector.load %arg10[%c1_64, %c0_65, %c0_66] : memref<4x32x8xf32, #tpu.memory_space<vmem>>, vector<1x32x8xf32>
    %64 = vector.shape_cast %63 : vector<1x32x8xf32> to vector<32x8xf32>
    %cst_67 = arith.constant dense<0.000000e+00> : vector<16x8xf32>
    %65 = tpu.matmul %12, %64, %cst_67 {dimension_numbers = #tpu.dot_dimension_numbers<[1], [0], [0], [1], [0, 0, 1, 1], [], []>} : vector<16x32xf32>, vector<32x8xf32>, vector<16x8xf32> -> vector<16x8xf32>
    %c1_68 = arith.constant 1 : index
    %c0_69 = arith.constant 0 : index
    %c0_70 = arith.constant 0 : index
    %66 = vector.load %arg11[%c1_68, %c0_69, %c0_70] : memref<4x1x8xf32, #tpu.memory_space<vmem>>, vector<1x1x8xf32>
    %67 = vector.shape_cast %66 : vector<1x1x8xf32> to vector<1x8xf32>
    %68 = vector.broadcast %67 : vector<1x8xf32> to vector<16x8xf32>
    %69 = arith.addf %65, %68 : vector<16x8xf32>
    %c0_71 = arith.constant 0 : index
    %c1_72 = arith.constant 1 : index
    %c0_73 = arith.constant 0 : index
    %c0_74 = arith.constant 0 : index
    %70 = vector.load %arg14[%c0_71, %c1_72, %c0_73, %c0_74] : memref<1x4x16x8xf32, #tpu.memory_space<vmem>>, vector<1x1x16x8xf32>
    %71 = vector.shape_cast %70 : vector<1x1x16x8xf32> to vector<16x8xf32>
    %72 = vector.shape_cast %69 : vector<16x8xf32> to vector<1x1x16x8xf32>
    tpu.vector_store %arg14[%c0_71, %c1_72, %c0_73, %c0_74], %72 {strides = array<i32>} : memref<1x4x16x8xf32, #tpu.memory_space<vmem>>, vector<1x1x16x8xf32>,
    %c2 = arith.constant 2 : index
    %c0_75 = arith.constant 0 : index
    %c0_76 = arith.constant 0 : index
    %73 = vector.load %arg6[%c2, %c0_75, %c0_76] : memref<4x32x8xf32, #tpu.memory_space<vmem>>, vector<1x32x8xf32>
    %74 = vector.shape_cast %73 : vector<1x32x8xf32> to vector<32x8xf32>
    %cst_77 = arith.constant dense<0.000000e+00> : vector<16x8xf32>
    %75 = tpu.matmul %12, %74, %cst_77 {dimension_numbers = #tpu.dot_dimension_numbers<[1], [0], [0], [1], [0, 0, 1, 1], [], []>} : vector<16x32xf32>, vector<32x8xf32>, vector<16x8xf32> -> vector<16x8xf32>
    %c2_78 = arith.constant 2 : index
    %c0_79 = arith.constant 0 : index
    %c0_80 = arith.constant 0 : index
    %76 = vector.load %arg7[%c2_78, %c0_79, %c0_80] : memref<4x1x8xf32, #tpu.memory_space<vmem>>, vector<1x1x8xf32>
    %77 = vector.shape_cast %76 : vector<1x1x8xf32> to vector<1x8xf32>
    %78 = vector.broadcast %77 : vector<1x8xf32> to vector<16x8xf32>
    %79 = arith.addf %75, %78 : vector<16x8xf32>
    %c0_81 = arith.constant 0 : index
    %c2_82 = arith.constant 2 : index
    %c0_83 = arith.constant 0 : index
    %c0_84 = arith.constant 0 : index
    %80 = vector.load %arg12[%c0_81, %c2_82, %c0_83, %c0_84] : memref<1x4x16x8xf32, #tpu.memory_space<vmem>>, vector<1x1x16x8xf32>
    %81 = vector.shape_cast %80 : vector<1x1x16x8xf32> to vector<16x8xf32>
    %82 = vector.shape_cast %79 : vector<16x8xf32> to vector<1x1x16x8xf32>
    tpu.vector_store %arg12[%c0_81, %c2_82, %c0_83, %c0_84], %82 {strides = array<i32>} : memref<1x4x16x8xf32, #tpu.memory_space<vmem>>, vector<1x1x16x8xf32>,
    %c2_85 = arith.constant 2 : index
    %c0_86 = arith.constant 0 : index
    %c0_87 = arith.constant 0 : index
    %83 = vector.load %arg8[%c2_85, %c0_86, %c0_87] : memref<4x32x8xf32, #tpu.memory_space<vmem>>, vector<1x32x8xf32>
    %84 = vector.shape_cast %83 : vector<1x32x8xf32> to vector<32x8xf32>
    %cst_88 = arith.constant dense<0.000000e+00> : vector<16x8xf32>
    %85 = tpu.matmul %12, %84, %cst_88 {dimension_numbers = #tpu.dot_dimension_numbers<[1], [0], [0], [1], [0, 0, 1, 1], [], []>} : vector<16x32xf32>, vector<32x8xf32>, vector<16x8xf32> -> vector<16x8xf32>
    %c2_89 = arith.constant 2 : index
    %c0_90 = arith.constant 0 : index
    %c0_91 = arith.constant 0 : index
    %86 = vector.load %arg9[%c2_89, %c0_90, %c0_91] : memref<4x1x8xf32, #tpu.memory_space<vmem>>, vector<1x1x8xf32>
    %87 = vector.shape_cast %86 : vector<1x1x8xf32> to vector<1x8xf32>
    %88 = vector.broadcast %87 : vector<1x8xf32> to vector<16x8xf32>
    %89 = arith.addf %85, %88 : vector<16x8xf32>
    %c0_92 = arith.constant 0 : index
    %c2_93 = arith.constant 2 : index
    %c0_94 = arith.constant 0 : index
    %c0_95 = arith.constant 0 : index
    %90 = vector.load %arg13[%c0_92, %c2_93, %c0_94, %c0_95] : memref<1x4x16x8xf32, #tpu.memory_space<vmem>>, vector<1x1x16x8xf32>
    %91 = vector.shape_cast %90 : vector<1x1x16x8xf32> to vector<16x8xf32>
    %92 = vector.shape_cast %89 : vector<16x8xf32> to vector<1x1x16x8xf32>
    tpu.vector_store %arg13[%c0_92, %c2_93, %c0_94, %c0_95], %92 {strides = array<i32>} : memref<1x4x16x8xf32, #tpu.memory_space<vmem>>, vector<1x1x16x8xf32>,
    %c2_96 = arith.constant 2 : index
    %c0_97 = arith.constant 0 : index
    %c0_98 = arith.constant 0 : index
    %93 = vector.load %arg10[%c2_96, %c0_97, %c0_98] : memref<4x32x8xf32, #tpu.memory_space<vmem>>, vector<1x32x8xf32>
    %94 = vector.shape_cast %93 : vector<1x32x8xf32> to vector<32x8xf32>
    %cst_99 = arith.constant dense<0.000000e+00> : vector<16x8xf32>
    %95 = tpu.matmul %12, %94, %cst_99 {dimension_numbers = #tpu.dot_dimension_numbers<[1], [0], [0], [1], [0, 0, 1, 1], [], []>} : vector<16x32xf32>, vector<32x8xf32>, vector<16x8xf32> -> vector<16x8xf32>
    %c2_100 = arith.constant 2 : index
    %c0_101 = arith.constant 0 : index
    %c0_102 = arith.constant 0 : index
    %96 = vector.load %arg11[%c2_100, %c0_101, %c0_102] : memref<4x1x8xf32, #tpu.memory_space<vmem>>, vector<1x1x8xf32>
    %97 = vector.shape_cast %96 : vector<1x1x8xf32> to vector<1x8xf32>
    %98 = vector.broadcast %97 : vector<1x8xf32> to vector<16x8xf32>
    %99 = arith.addf %95, %98 : vector<16x8xf32>
    %c0_103 = arith.constant 0 : index
    %c2_104 = arith.constant 2 : index
    %c0_105 = arith.constant 0 : index
    %c0_106 = arith.constant 0 : index
    %100 = vector.load %arg14[%c0_103, %c2_104, %c0_105, %c0_106] : memref<1x4x16x8xf32, #tpu.memory_space<vmem>>, vector<1x1x16x8xf32>
    %101 = vector.shape_cast %100 : vector<1x1x16x8xf32> to vector<16x8xf32>
    %102 = vector.shape_cast %99 : vector<16x8xf32> to vector<1x1x16x8xf32>
    tpu.vector_store %arg14[%c0_103, %c2_104, %c0_105, %c0_106], %102 {strides = array<i32>} : memref<1x4x16x8xf32, #tpu.memory_space<vmem>>, vector<1x1x16x8xf32>,
    %c3 = arith.constant 3 : index
    %c0_107 = arith.constant 0 : index
    %c0_108 = arith.constant 0 : index
    %103 = vector.load %arg6[%c3, %c0_107, %c0_108] : memref<4x32x8xf32, #tpu.memory_space<vmem>>, vector<1x32x8xf32>
    %104 = vector.shape_cast %103 : vector<1x32x8xf32> to vector<32x8xf32>
    %cst_109 = arith.constant dense<0.000000e+00> : vector<16x8xf32>
    %105 = tpu.matmul %12, %104, %cst_109 {dimension_numbers = #tpu.dot_dimension_numbers<[1], [0], [0], [1], [0, 0, 1, 1], [], []>} : vector<16x32xf32>, vector<32x8xf32>, vector<16x8xf32> -> vector<16x8xf32>
    %c3_110 = arith.constant 3 : index
    %c0_111 = arith.constant 0 : index
    %c0_112 = arith.constant 0 : index
    %106 = vector.load %arg7[%c3_110, %c0_111, %c0_112] : memref<4x1x8xf32, #tpu.memory_space<vmem>>, vector<1x1x8xf32>
    %107 = vector.shape_cast %106 : vector<1x1x8xf32> to vector<1x8xf32>
    %108 = vector.broadcast %107 : vector<1x8xf32> to vector<16x8xf32>
    %109 = arith.addf %105, %108 : vector<16x8xf32>
    %c0_113 = arith.constant 0 : index
    %c3_114 = arith.constant 3 : index
    %c0_115 = arith.constant 0 : index
    %c0_116 = arith.constant 0 : index
    %110 = vector.load %arg12[%c0_113, %c3_114, %c0_115, %c0_116] : memref<1x4x16x8xf32, #tpu.memory_space<vmem>>, vector<1x1x16x8xf32>
    %111 = vector.shape_cast %110 : vector<1x1x16x8xf32> to vector<16x8xf32>
    %112 = vector.shape_cast %109 : vector<16x8xf32> to vector<1x1x16x8xf32>
    tpu.vector_store %arg12[%c0_113, %c3_114, %c0_115, %c0_116], %112 {strides = array<i32>} : memref<1x4x16x8xf32, #tpu.memory_space<vmem>>, vector<1x1x16x8xf32>,
    %c3_117 = arith.constant 3 : index
    %c0_118 = arith.constant 0 : index
    %c0_119 = arith.constant 0 : index
    %113 = vector.load %arg8[%c3_117, %c0_118, %c0_119] : memref<4x32x8xf32, #tpu.memory_space<vmem>>, vector<1x32x8xf32>
    %114 = vector.shape_cast %113 : vector<1x32x8xf32> to vector<32x8xf32>
    %cst_120 = arith.constant dense<0.000000e+00> : vector<16x8xf32>
    %115 = tpu.matmul %12, %114, %cst_120 {dimension_numbers = #tpu.dot_dimension_numbers<[1], [0], [0], [1], [0, 0, 1, 1], [], []>} : vector<16x32xf32>, vector<32x8xf32>, vector<16x8xf32> -> vector<16x8xf32>
    %c3_121 = arith.constant 3 : index
    %c0_122 = arith.constant 0 : index
    %c0_123 = arith.constant 0 : index
    %116 = vector.load %arg9[%c3_121, %c0_122, %c0_123] : memref<4x1x8xf32, #tpu.memory_space<vmem>>, vector<1x1x8xf32>
    %117 = vector.shape_cast %116 : vector<1x1x8xf32> to vector<1x8xf32>
    %118 = vector.broadcast %117 : vector<1x8xf32> to vector<16x8xf32>
    %119 = arith.addf %115, %118 : vector<16x8xf32>
    %c0_124 = arith.constant 0 : index
    %c3_125 = arith.constant 3 : index
    %c0_126 = arith.constant 0 : index
    %c0_127 = arith.constant 0 : index
    %120 = vector.load %arg13[%c0_124, %c3_125, %c0_126, %c0_127] : memref<1x4x16x8xf32, #tpu.memory_space<vmem>>, vector<1x1x16x8xf32>
    %121 = vector.shape_cast %120 : vector<1x1x16x8xf32> to vector<16x8xf32>
    %122 = vector.shape_cast %119 : vector<16x8xf32> to vector<1x1x16x8xf32>
    tpu.vector_store %arg13[%c0_124, %c3_125, %c0_126, %c0_127], %122 {strides = array<i32>} : memref<1x4x16x8xf32, #tpu.memory_space<vmem>>, vector<1x1x16x8xf32>,
    %c3_128 = arith.constant 3 : index
    %c0_129 = arith.constant 0 : index
    %c0_130 = arith.constant 0 : index
    %123 = vector.load %arg10[%c3_128, %c0_129, %c0_130] : memref<4x32x8xf32, #tpu.memory_space<vmem>>, vector<1x32x8xf32>
    %124 = vector.shape_cast %123 : vector<1x32x8xf32> to vector<32x8xf32>
    %cst_131 = arith.constant dense<0.000000e+00> : vector<16x8xf32>
    %125 = tpu.matmul %12, %124, %cst_131 {dimension_numbers = #tpu.dot_dimension_numbers<[1], [0], [0], [1], [0, 0, 1, 1], [], []>} : vector<16x32xf32>, vector<32x8xf32>, vector<16x8xf32> -> vector<16x8xf32>
    %c3_132 = arith.constant 3 : index
    %c0_133 = arith.constant 0 : index
    %c0_134 = arith.constant 0 : index
    %126 = vector.load %arg11[%c3_132, %c0_133, %c0_134] : memref<4x1x8xf32, #tpu.memory_space<vmem>>, vector<1x1x8xf32>
    %127 = vector.shape_cast %126 : vector<1x1x8xf32> to vector<1x8xf32>
    %128 = vector.broadcast %127 : vector<1x8xf32> to vector<16x8xf32>
    %129 = arith.addf %125, %128 : vector<16x8xf32>
    %c0_135 = arith.constant 0 : index
    %c3_136 = arith.constant 3 : index
    %c0_137 = arith.constant 0 : index
    %c0_138 = arith.constant 0 : index
    %130 = vector.load %arg14[%c0_135, %c3_136, %c0_137, %c0_138] : memref<1x4x16x8xf32, #tpu.memory_space<vmem>>, vector<1x1x16x8xf32>
    %131 = vector.shape_cast %130 : vector<1x1x16x8xf32> to vector<16x8xf32>
    %132 = vector.shape_cast %129 : vector<16x8xf32> to vector<1x1x16x8xf32>
    tpu.vector_store %arg14[%c0_135, %c3_136, %c0_137, %c0_138], %132 {strides = array<i32>} : memref<1x4x16x8xf32, #tpu.memory_space<vmem>>, vector<1x1x16x8xf32>,
    return
  }
  func.func @transform_0(%arg0: i32, %arg1: i32) -> (i32, i32, i32) {
    %c0_i32 = arith.constant 0 : i32
    %c0_i32_0 = arith.constant 0 : i32
    return %arg0, %arg1, %c0_i32 : i32, i32, i32
  }
  func.func @transform_1(%arg0: i32, %arg1: i32) -> (i32, i32, i32) {
    %c0_i32 = arith.constant 0 : i32
    %c0_i32_0 = arith.constant 0 : i32
    return %arg0, %arg1, %c0_i32 : i32, i32, i32
  }
  func.func @transform_2(%arg0: i32, %arg1: i32) -> (i32, i32) {
    %c0_i32 = arith.constant 0 : i32
    %c0_i32_0 = arith.constant 0 : i32
    %c0_i32_1 = arith.constant 0 : i32
    return %c0_i32, %c0_i32_0 : i32, i32
  }
  func.func @transform_3(%arg0: i32, %arg1: i32) -> (i32, i32) {
    %c0_i32 = arith.constant 0 : i32
    %c0_i32_0 = arith.constant 0 : i32
    %c0_i32_1 = arith.constant 0 : i32
    return %c0_i32, %c0_i32_0 : i32, i32
  }
  func.func @transform_4(%arg0: i32, %arg1: i32) -> (i32, i32, i32) {
    %c0_i32 = arith.constant 0 : i32
    %c0_i32_0 = arith.constant 0 : i32
    %c0_i32_1 = arith.constant 0 : i32
    %c0_i32_2 = arith.constant 0 : i32
    return %c0_i32, %c0_i32_0, %c0_i32_1 : i32, i32, i32
  }
  func.func @transform_5(%arg0: i32, %arg1: i32) -> (i32, i32, i32) {
    %c0_i32 = arith.constant 0 : i32
    %c0_i32_0 = arith.constant 0 : i32
    %c0_i32_1 = arith.constant 0 : i32
    %c0_i32_2 = arith.constant 0 : i32
    return %c0_i32, %c0_i32_0, %c0_i32_1 : i32, i32, i32
  }
  func.func @transform_6(%arg0: i32, %arg1: i32) -> (i32, i32, i32) {
    %c0_i32 = arith.constant 0 : i32
    %c0_i32_0 = arith.constant 0 : i32
    %c0_i32_1 = arith.constant 0 : i32
    %c0_i32_2 = arith.constant 0 : i32
    return %c0_i32, %c0_i32_0, %c0_i32_1 : i32, i32, i32
  }
  func.func @transform_7(%arg0: i32, %arg1: i32) -> (i32, i32, i32) {
    %c0_i32 = arith.constant 0 : i32
    %c0_i32_0 = arith.constant 0 : i32
    %c0_i32_1 = arith.constant 0 : i32
    %c0_i32_2 = arith.constant 0 : i32
    return %c0_i32, %c0_i32_0, %c0_i32_1 : i32, i32, i32
  }
  func.func @transform_8(%arg0: i32, %arg1: i32) -> (i32, i32, i32) {
    %c0_i32 = arith.constant 0 : i32
    %c0_i32_0 = arith.constant 0 : i32
    %c0_i32_1 = arith.constant 0 : i32
    %c0_i32_2 = arith.constant 0 : i32
    return %c0_i32, %c0_i32_0, %c0_i32_1 : i32, i32, i32
  }
  func.func @transform_9(%arg0: i32, %arg1: i32) -> (i32, i32, i32) {
    %c0_i32 = arith.constant 0 : i32
    %c0_i32_0 = arith.constant 0 : i32
    %c0_i32_1 = arith.constant 0 : i32
    %c0_i32_2 = arith.constant 0 : i32
    return %c0_i32, %c0_i32_0, %c0_i32_1 : i32, i32, i32
  }
  func.func @transform_10(%arg0: i32, %arg1: i32) -> (i32, i32, i32, i32) {
    %c0_i32 = arith.constant 0 : i32
    %c0_i32_0 = arith.constant 0 : i32
    %c0_i32_1 = arith.constant 0 : i32
    return %arg0, %c0_i32, %arg1, %c0_i32_0 : i32, i32, i32, i32
  }
  func.func @transform_11(%arg0: i32, %arg1: i32) -> (i32, i32, i32, i32) {
    %c0_i32 = arith.constant 0 : i32
    %c0_i32_0 = arith.constant 0 : i32
    %c0_i32_1 = arith.constant 0 : i32
    return %arg0, %c0_i32, %arg1, %c0_i32_0 : i32, i32, i32, i32
  }
  func.func @transform_12(%arg0: i32, %arg1: i32) -> (i32, i32, i32, i32) {
    %c0_i32 = arith.constant 0 : i32
    %c0_i32_0 = arith.constant 0 : i32
    %c0_i32_1 = arith.constant 0 : i32
    return %arg0, %c0_i32, %arg1, %c0_i32_0 : i32, i32, i32, i32
  }
}

</mosaic_0001>

<llo_original>
// kernel: tpu_custom_call.1
$region0: #{tpu_custom_call.1}
  #allocation0 [shape = 'u32[]', space=smem, size = 0x4, offset = 0x4, fixed_abs, tag = 'smem constant byte address 0x4 - core index']
  #allocation1 [shape = 'u32[72,128]{1,0:T(1,128)}', space=vmem, size = 0x9000, scoped, tag = 'internal scratch']
  %s0 = inlined_call_operand.vmem [shape: f32[2,16,32], index: 0, kind: input, shape index: {}]
  %s1 = inlined_call_operand.vmem [shape: f32[2,16,32], index: 1, kind: input, shape index: {}]
  %s2 = inlined_call_operand.vmem [shape: f32[32,32], index: 2, kind: input, shape index: {}]
  %s3 = inlined_call_operand.vmem [shape: f32[1,32], index: 3, kind: input, shape index: {}]
  %s4 = inlined_call_operand.vmem [shape: f32[4,32,8], index: 4, kind: input, shape index: {}]
  %s5 = inlined_call_operand.vmem [shape: f32[4,1,8], index: 5, kind: input, shape index: {}]
  %s6 = inlined_call_operand.vmem [shape: f32[4,32,8], index: 6, kind: input, shape index: {}]
  %s7 = inlined_call_operand.vmem [shape: f32[4,1,8], index: 7, kind: input, shape index: {}]
  %s8 = inlined_call_operand.vmem [shape: f32[4,32,8], index: 8, kind: input, shape index: {}]
  %s9 = inlined_call_operand.vmem [shape: f32[4,1,8], index: 9, kind: input, shape index: {}]
  %s10 = inlined_call_operand.vmem [shape: f32[2,4,16,8], index: 10, kind: output, shape index: {0}]
  %s11 = inlined_call_operand.vmem [shape: f32[2,4,16,8], index: 11, kind: output, shape index: {1}]
  %s12 = inlined_call_operand.vmem [shape: f32[2,4,16,8], index: 12, kind: output, shape index: {2}]
  %13 = xla_tuple %s10, %s11, %s12
  %s14 = sld [smem:[#allocation0]]
  $region89: #{tpu_custom_call.1} parent=0
    _
  %s16 = ssub.s32 1, %s14
  %s17 = scalar_select 0, %s16, %s14
  loop: start=0, step=1, limit=4
  $region2: #{tpu_custom_call.1} parent=0 // loop_pre_header
    _
  $region3: #{tpu_custom_call.1} parent=0 // loop_header
    %s19 = sphi 0, %s23
    %p20 = scmp.ge.s32.totalorder %s19, 4
    %s26 = sphi 0, %s38
    %s27 = sphi 0, %s34
    %s28 = sphi 0, %s26
    %s29 = sphi 0, %s27
    %s30 = sphi 0, %s28
    %s31 = sphi 0, %s29
    %s43 = sphi 0, %s45
    %s46 = sphi 0, %s43
    %s47 = sphi 0, %s46
    %s63 = sphi 0, %s47
    %s71 = sphi 0, %s73
    %s74 = sphi 0, %s71
    %s75 = sphi 0, %s74
    %s91 = sphi 0, %s75
    %s95 = sphi 0, %s95
    %s97 = sphi 0, %s95
    %s98 = sphi 0, %s97
    %s112 = sphi 0, %s98
    %s116 = sphi 0, %s116
    %s118 = sphi 0, %s116
    %s119 = sphi 0, %s118
    %s133 = sphi 0, %s119
    %s137 = sphi 0, %s137
    %s139 = sphi 0, %s137
    %s140 = sphi 0, %s139
    %s154 = sphi 0, %s140
    %s158 = sphi 0, %s158
    %s160 = sphi 0, %s158
    %s161 = sphi 0, %s160
    %s175 = sphi 0, %s161
    %s179 = sphi 0, %s179
    %s181 = sphi 0, %s179
    %s182 = sphi 0, %s181
    %s196 = sphi 0, %s182
    %s200 = sphi 0, %s200
    %s202 = sphi 0, %s200
    %s203 = sphi 0, %s202
    %s217 = sphi 0, %s203
    %s221 = sphi 0, %s221
    %s223 = sphi 0, %s221
    %s224 = sphi 0, %s223
    %s238 = sphi 0, %s224
    %s242 = sphi 0, %s242
    %s244 = sphi 0, %s242
    %s245 = sphi 0, %s244
    %s259 = sphi 0, %s245
    %s267 = sphi 0, %s269
    %s270 = sphi 0, %s267
    %s271 = sphi 0, %s270
    %s287 = sphi 0, %s271
    %s295 = sphi 0, %s297
    %s298 = sphi 0, %s295
    %s299 = sphi 0, %s298
    %s315 = sphi 0, %s299
    %s323 = sphi 0, %s325
    %s326 = sphi 0, %s323
    %s327 = sphi 0, %s326
    %s343 = sphi 0, %s327
  $region4: #{tpu_custom_call.1} parent=0 // loop_header_branch
    %22 = sbr.rel (%p20) target = $region8
  $region5: #{tpu_custom_call.1} parent=0 // loop_body
    %s24 = ssub.s32 %s19, 1
    %s25 = ssub.s32 %s19, 2
    %s32 = sadd.s32 1, %s27
    %p33 = scmp.ge.s32.totalorder %s32, 1
    %s34 = scalar_select %p33, 0, %s32
    %s35 = sadd.s32 1, %s26
    %s36 = scalar_select %p33, %s35, %s26
    %p37 = scmp.ge.s32.totalorder %s36, 2
    %s38 = scalar_select %p37, 0, %s36
    %s39 = ssub.s32 %s26, %s38
    %s40 = ssub.s32 %s27, %s34
    %s41 = sor.u32 %s39, %s40
    %p42 = scmp.eq.s32.totalorder %s41, 0
    %s44 = sadd.s32 %s43, 1
    %s45 = scalar_select %p42, %s43, %s44
    %p48 = pneg %p42
    %p49 = scmp.eq.s32.totalorder %s19, 1
    %p50 = por %p48, %p49
    %p51 = scmp.ne.s32.totalorder %s43, %s46
    %p52 = scmp.eq.s32.totalorder %s19, 0
    %p53 = por %p51, %p52
    %p54 = scmp.ne.s32.totalorder %s43, %s46
    %p55 = scmp.eq.s32.totalorder %s24, 1
    %p56 = por %p54, %p55
    %p57 = scmp.ne.s32.totalorder %s46, %s47
    %p58 = scmp.eq.s32.totalorder %s24, 0
    %p59 = por %p57, %p58
    %p60 = scmp.ne.s32.totalorder %s46, %s47
    %p61 = scmp.eq.s32.totalorder %s25, 1
    %p62 = por %p60, %p61
    %p64 = scmp.ne.s32.totalorder %s47, %s63
    %p65 = scmp.eq.s32.totalorder %s25, 0
    %p66 = por %p64, %p65
    %s67 = ssub.s32 %s26, %s38
    %s68 = ssub.s32 %s27, %s34
    %s69 = sor.u32 %s67, %s68
    %p70 = scmp.eq.s32.totalorder %s69, 0
    %s72 = sadd.s32 %s71, 1
    %s73 = scalar_select %p70, %s71, %s72
    %p76 = pneg %p70
    %p77 = scmp.eq.s32.totalorder %s19, 1
    %p78 = por %p76, %p77
    %p79 = scmp.ne.s32.totalorder %s71, %s74
    %p80 = scmp.eq.s32.totalorder %s19, 0
    %p81 = por %p79, %p80
    %p82 = scmp.ne.s32.totalorder %s71, %s74
    %p83 = scmp.eq.s32.totalorder %s24, 1
    %p84 = por %p82, %p83
    %p85 = scmp.ne.s32.totalorder %s74, %s75
    %p86 = scmp.eq.s32.totalorder %s24, 0
    %p87 = por %p85, %p86
    %p88 = scmp.ne.s32.totalorder %s74, %s75
    %p89 = scmp.eq.s32.totalorder %s25, 1
    %p90 = por %p88, %p89
    %p92 = scmp.ne.s32.totalorder %s75, %s91
    %p93 = scmp.eq.s32.totalorder %s25, 0
    %p94 = por %p92, %p93
    %s96 = sadd.s32 %s95, 1
    %p99 = scmp.eq.s32.totalorder %s19, 1
    %p100 = scmp.ne.s32.totalorder %s95, %s97
    %p101 = scmp.eq.s32.totalorder %s19, 0
    %p102 = por %p100, %p101
    %p103 = scmp.ne.s32.totalorder %s95, %s97
    %p104 = scmp.eq.s32.totalorder %s24, 1
    %p105 = por %p103, %p104
    %p106 = scmp.ne.s32.totalorder %s97, %s98
    %p107 = scmp.eq.s32.totalorder %s24, 0
    %p108 = por %p106, %p107
    %p109 = scmp.ne.s32.totalorder %s97, %s98
    %p110 = scmp.eq.s32.totalorder %s25, 1
    %p111 = por %p109, %p110
    %p113 = scmp.ne.s32.totalorder %s98, %s112
    %p114 = scmp.eq.s32.totalorder %s25, 0
    %p115 = por %p113, %p114
    %s117 = sadd.s32 %s116, 1
    %p120 = scmp.eq.s32.totalorder %s19, 1
    %p121 = scmp.ne.s32.totalorder %s116, %s118
    %p122 = scmp.eq.s32.totalorder %s19, 0
    %p123 = por %p121, %p122
    %p124 = scmp.ne.s32.totalorder %s116, %s118
    %p125 = scmp.eq.s32.totalorder %s24, 1
    %p126 = por %p124, %p125
    %p127 = scmp.ne.s32.totalorder %s118, %s119
    %p128 = scmp.eq.s32.totalorder %s24, 0
    %p129 = por %p127, %p128
    %p130 = scmp.ne.s32.totalorder %s118, %s119
    %p131 = scmp.eq.s32.totalorder %s25, 1
    %p132 = por %p130, %p131
    %p134 = scmp.ne.s32.totalorder %s119, %s133
    %p135 = scmp.eq.s32.totalorder %s25, 0
    %p136 = por %p134, %p135
    %s138 = sadd.s32 %s137, 1
    %p141 = scmp.eq.s32.totalorder %s19, 1
    %p142 = scmp.ne.s32.totalorder %s137, %s139
    %p143 = scmp.eq.s32.totalorder %s19, 0
    %p144 = por %p142, %p143
    %p145 = scmp.ne.s32.totalorder %s137, %s139
    %p146 = scmp.eq.s32.totalorder %s24, 1
    %p147 = por %p145, %p146
    %p148 = scmp.ne.s32.totalorder %s139, %s140
    %p149 = scmp.eq.s32.totalorder %s24, 0
    %p150 = por %p148, %p149
    %p151 = scmp.ne.s32.totalorder %s139, %s140
    %p152 = scmp.eq.s32.totalorder %s25, 1
    %p153 = por %p151, %p152
    %p155 = scmp.ne.s32.totalorder %s140, %s154
    %p156 = scmp.eq.s32.totalorder %s25, 0
    %p157 = por %p155, %p156
    %s159 = sadd.s32 %s158, 1
    %p162 = scmp.eq.s32.totalorder %s19, 1
    %p163 = scmp.ne.s32.totalorder %s158, %s160
    %p164 = scmp.eq.s32.totalorder %s19, 0
    %p165 = por %p163, %p164
    %p166 = scmp.ne.s32.totalorder %s158, %s160
    %p167 = scmp.eq.s32.totalorder %s24, 1
    %p168 = por %p166, %p167
    %p169 = scmp.ne.s32.totalorder %s160, %s161
    %p170 = scmp.eq.s32.totalorder %s24, 0
    %p171 = por %p169, %p170
    %p172 = scmp.ne.s32.totalorder %s160, %s161
    %p173 = scmp.eq.s32.totalorder %s25, 1
    %p174 = por %p172, %p173
    %p176 = scmp.ne.s32.totalorder %s161, %s175
    %p177 = scmp.eq.s32.totalorder %s25, 0
    %p178 = por %p176, %p177
    %s180 = sadd.s32 %s179, 1
    %p183 = scmp.eq.s32.totalorder %s19, 1
    %p184 = scmp.ne.s32.totalorder %s179, %s181
    %p185 = scmp.eq.s32.totalorder %s19, 0
    %p186 = por %p184, %p185
    %p187 = scmp.ne.s32.totalorder %s179, %s181
    %p188 = scmp.eq.s32.totalorder %s24, 1
    %p189 = por %p187, %p188
    %p190 = scmp.ne.s32.totalorder %s181, %s182
    %p191 = scmp.eq.s32.totalorder %s24, 0
    %p192 = por %p190, %p191
    %p193 = scmp.ne.s32.totalorder %s181, %s182
    %p194 = scmp.eq.s32.totalorder %s25, 1
    %p195 = por %p193, %p194
    %p197 = scmp.ne.s32.totalorder %s182, %s196
    %p198 = scmp.eq.s32.totalorder %s25, 0
    %p199 = por %p197, %p198
    %s201 = sadd.s32 %s200, 1
    %p204 = scmp.eq.s32.totalorder %s19, 1
    %p205 = scmp.ne.s32.totalorder %s200, %s202
    %p206 = scmp.eq.s32.totalorder %s19, 0
    %p207 = por %p205, %p206
    %p208 = scmp.ne.s32.totalorder %s200, %s202
    %p209 = scmp.eq.s32.totalorder %s24, 1
    %p210 = por %p208, %p209
    %p211 = scmp.ne.s32.totalorder %s202, %s203
    %p212 = scmp.eq.s32.totalorder %s24, 0
    %p213 = por %p211, %p212
    %p214 = scmp.ne.s32.totalorder %s202, %s203
    %p215 = scmp.eq.s32.totalorder %s25, 1
    %p216 = por %p214, %p215
    %p218 = scmp.ne.s32.totalorder %s203, %s217
    %p219 = scmp.eq.s32.totalorder %s25, 0
    %p220 = por %p218, %p219
    %s222 = sadd.s32 %s221, 1
    %p225 = scmp.eq.s32.totalorder %s19, 1
    %p226 = scmp.ne.s32.totalorder %s221, %s223
    %p227 = scmp.eq.s32.totalorder %s19, 0
    %p228 = por %p226, %p227
    %p229 = scmp.ne.s32.totalorder %s221, %s223
    %p230 = scmp.eq.s32.totalorder %s24, 1
    %p231 = por %p229, %p230
    %p232 = scmp.ne.s32.totalorder %s223, %s224
    %p233 = scmp.eq.s32.totalorder %s24, 0
    %p234 = por %p232, %p233
    %p235 = scmp.ne.s32.totalorder %s223, %s224
    %p236 = scmp.eq.s32.totalorder %s25, 1
    %p237 = por %p235, %p236
    %p239 = scmp.ne.s32.totalorder %s224, %s238
    %p240 = scmp.eq.s32.totalorder %s25, 0
    %p241 = por %p239, %p240
    %s243 = sadd.s32 %s242, 1
    %p246 = scmp.eq.s32.totalorder %s19, 1
    %p247 = scmp.ne.s32.totalorder %s242, %s244
    %p248 = scmp.eq.s32.totalorder %s19, 0
    %p249 = por %p247, %p248
    %p250 = scmp.ne.s32.totalorder %s242, %s244
    %p251 = scmp.eq.s32.totalorder %s24, 1
    %p252 = por %p250, %p251
    %p253 = scmp.ne.s32.totalorder %s244, %s245
    %p254 = scmp.eq.s32.totalorder %s24, 0
    %p255 = por %p253, %p254
    %p256 = scmp.ne.s32.totalorder %s244, %s245
    %p257 = scmp.eq.s32.totalorder %s25, 1
    %p258 = por %p256, %p257
    %p260 = scmp.ne.s32.totalorder %s245, %s259
    %p261 = scmp.eq.s32.totalorder %s25, 0
    %p262 = por %p260, %p261
    %s263 = ssub.s32 %s26, %s38
    %s264 = ssub.s32 %s27, %s34
    %s265 = sor.u32 %s263, %s264
    %p266 = scmp.eq.s32.totalorder %s265, 0
    %s268 = sadd.s32 %s267, 1
    %s269 = scalar_select %p266, %s267, %s268
    %p272 = pneg %p266
    %p273 = scmp.eq.s32.totalorder %s19, 1
    %p274 = por %p272, %p273
    %p275 = scmp.ne.s32.totalorder %s267, %s270
    %p276 = scmp.eq.s32.totalorder %s19, 0
    %p277 = por %p275, %p276
    %p278 = scmp.ne.s32.totalorder %s267, %s270
    %p279 = scmp.eq.s32.totalorder %s24, 1
    %p280 = por %p278, %p279
    %p281 = scmp.ne.s32.totalorder %s270, %s271
    %p282 = scmp.eq.s32.totalorder %s24, 0
    %p283 = por %p281, %p282
    %p284 = scmp.ne.s32.totalorder %s270, %s271
    %p285 = scmp.eq.s32.totalorder %s25, 1
    %p286 = por %p284, %p285
    %p288 = scmp.ne.s32.totalorder %s271, %s287
    %p289 = scmp.eq.s32.totalorder %s25, 0
    %p290 = por %p288, %p289
    %s291 = ssub.s32 %s26, %s38
    %s292 = ssub.s32 %s27, %s34
    %s293 = sor.u32 %s291, %s292
    %p294 = scmp.eq.s32.totalorder %s293, 0
    %s296 = sadd.s32 %s295, 1
    %s297 = scalar_select %p294, %s295, %s296
    %p300 = pneg %p294
    %p301 = scmp.eq.s32.totalorder %s19, 1
    %p302 = por %p300, %p301
    %p303 = scmp.ne.s32.totalorder %s295, %s298
    %p304 = scmp.eq.s32.totalorder %s19, 0
    %p305 = por %p303, %p304
    %p306 = scmp.ne.s32.totalorder %s295, %s298
    %p307 = scmp.eq.s32.totalorder %s24, 1
    %p308 = por %p306, %p307
    %p309 = scmp.ne.s32.totalorder %s298, %s299
    %p310 = scmp.eq.s32.totalorder %s24, 0
    %p311 = por %p309, %p310
    %p312 = scmp.ne.s32.totalorder %s298, %s299
    %p313 = scmp.eq.s32.totalorder %s25, 1
    %p314 = por %p312, %p313
    %p316 = scmp.ne.s32.totalorder %s299, %s315
    %p317 = scmp.eq.s32.totalorder %s25, 0
    %p318 = por %p316, %p317
    %s319 = ssub.s32 %s26, %s38
    %s320 = ssub.s32 %s27, %s34
    %s321 = sor.u32 %s319, %s320
    %p322 = scmp.eq.s32.totalorder %s321, 0
    %s324 = sadd.s32 %s323, 1
    %s325 = scalar_select %p322, %s323, %s324
    %p328 = pneg %p322
    %p329 = scmp.eq.s32.totalorder %s19, 1
    %p330 = por %p328, %p329
    %p331 = scmp.ne.s32.totalorder %s323, %s326
    %p332 = scmp.eq.s32.totalorder %s19, 0
    %p333 = por %p331, %p332
    %p334 = scmp.ne.s32.totalorder %s323, %s326
    %p335 = scmp.eq.s32.totalorder %s24, 1
    %p336 = por %p334, %p335
    %p337 = scmp.ne.s32.totalorder %s326, %s327
    %p338 = scmp.eq.s32.totalorder %s24, 0
    %p339 = por %p337, %p338
    %p340 = scmp.ne.s32.totalorder %s326, %s327
    %p341 = scmp.eq.s32.totalorder %s25, 1
    %p342 = por %p340, %p341
    %p344 = scmp.ne.s32.totalorder %s327, %s343
    %p345 = scmp.eq.s32.totalorder %s25, 0
    %p346 = por %p344, %p345
    %p347 = scmp.le.s32.totalorder 1, %s19
    %p348 = scmp.lt.s32.totalorder %s19, 3
    %p349 = pnand %p347, %p348
    %p350 = pneg %p349
    // Predicated region
    $region9: #{tpu_custom_call.1} parent=5 // pred_check
      _
    $region10: #{tpu_custom_call.1} parent=5 // pred_check_branch
      %352 = sbr.rel (%p349) target = $region12
    $region11: #{tpu_custom_call.1} parent=5 // pred_region
      %s353 = ssub.s32 %s19, 1
      // Predicated region
      $region13: #{tpu_custom_call.1} parent=11 // pred_check
        %p354 = pneg %p108
      $region14: #{tpu_custom_call.1} parent=11 // pred_check_branch
        %356 = sbr.rel (%p354) target = $region16
      $region15: #{tpu_custom_call.1} parent=11 // pred_region
        _
      $region16: #{tpu_custom_call.1} parent=11 // pred_fallthru
        _
      // Predicated region
      $region17: #{tpu_custom_call.1} parent=11 // pred_check
        %p357 = pneg %p129
      $region18: #{tpu_custom_call.1} parent=11 // pred_check_branch
        %359 = sbr.rel (%p357) target = $region20
      $region19: #{tpu_custom_call.1} parent=11 // pred_region
        _
      $region20: #{tpu_custom_call.1} parent=11 // pred_fallthru
        _
      // Predicated region
      $region21: #{tpu_custom_call.1} parent=11 // pred_check
        %p360 = pneg %p150
      $region22: #{tpu_custom_call.1} parent=11 // pred_check_branch
        %362 = sbr.rel (%p360) target = $region24
      $region23: #{tpu_custom_call.1} parent=11 // pred_region
        _
      $region24: #{tpu_custom_call.1} parent=11 // pred_fallthru
        _
      // Predicated region
      $region25: #{tpu_custom_call.1} parent=11 // pred_check
        %p363 = pneg %p171
      $region26: #{tpu_custom_call.1} parent=11 // pred_check_branch
        %365 = sbr.rel (%p363) target = $region28
      $region27: #{tpu_custom_call.1} parent=11 // pred_region
        _
      $region28: #{tpu_custom_call.1} parent=11 // pred_fallthru
        _
      // Predicated region
      $region29: #{tpu_custom_call.1} parent=11 // pred_check
        %p366 = pneg %p192
      $region30: #{tpu_custom_call.1} parent=11 // pred_check_branch
        %368 = sbr.rel (%p366) target = $region32
      $region31: #{tpu_custom_call.1} parent=11 // pred_region
        _
      $region32: #{tpu_custom_call.1} parent=11 // pred_fallthru
        _
      // Predicated region
      $region33: #{tpu_custom_call.1} parent=11 // pred_check
        %p369 = pneg %p213
      $region34: #{tpu_custom_call.1} parent=11 // pred_check_branch
        %371 = sbr.rel (%p369) target = $region36
      $region35: #{tpu_custom_call.1} parent=11 // pred_region
        _
      $region36: #{tpu_custom_call.1} parent=11 // pred_fallthru
        _
      // Predicated region
      $region37: #{tpu_custom_call.1} parent=11 // pred_check
        %p372 = pneg %p234
      $region38: #{tpu_custom_call.1} parent=11 // pred_check_branch
        %374 = sbr.rel (%p372) target = $region40
      $region39: #{tpu_custom_call.1} parent=11 // pred_region
        _
      $region40: #{tpu_custom_call.1} parent=11 // pred_fallthru
        _
      // Predicated region
      $region41: #{tpu_custom_call.1} parent=11 // pred_check
        %p375 = pneg %p255
      $region42: #{tpu_custom_call.1} parent=11 // pred_check_branch
        %377 = sbr.rel (%p375) target = $region44
      $region43: #{tpu_custom_call.1} parent=11 // pred_region
        _
      $region44: #{tpu_custom_call.1} parent=11 // pred_fallthru
        _
    $region12: #{tpu_custom_call.1} parent=5 // pred_fallthru
      _
    %p378 = scmp.lt.s32.totalorder %s19, 2
    // Predicated region
    $region45: #{tpu_custom_call.1} parent=5 // pred_check
      %p379 = pneg %p378
    $region46: #{tpu_custom_call.1} parent=5 // pred_check_branch
      %381 = sbr.rel (%p379) target = $region48
    $region47: #{tpu_custom_call.1} parent=5 // pred_region
      // Predicated region
      $region49: #{tpu_custom_call.1} parent=47 // pred_check
        %p382 = pneg %p53
      $region50: #{tpu_custom_call.1} parent=47 // pred_check_branch
        %384 = sbr.rel (%p382) target = $region52
      $region51: #{tpu_custom_call.1} parent=47 // pred_region
        %s385 = smul.u32 2, %s27
        %p386 = scmp.lt.s32.totalorder %s26, 1
        %s387 = scalar_select %p386, %s26, 1
        %p388 = scmp.lt.s32.totalorder %s385, 1
        %s389 = scalar_select %p388, %s385, 1
        %s390 = smul.addr %s387, 2
        %s391 = sadd.s32 %s389, %s390
        %s392 = smul.addr %s391, 8
        %s393 = scalar_lea.vmem %s0, %s392
        %s394 = smul.u32 2, %s27
      $region52: #{tpu_custom_call.1} parent=47 // pred_fallthru
        _
      // Predicated region
      $region53: #{tpu_custom_call.1} parent=47 // pred_check
        %p395 = pneg %p81
      $region54: #{tpu_custom_call.1} parent=47 // pred_check_branch
        %397 = sbr.rel (%p395) target = $region56
      $region55: #{tpu_custom_call.1} parent=47 // pred_region
        %s398 = smul.u32 2, %s27
        %p399 = scmp.lt.s32.totalorder %s26, 1
        %s400 = scalar_select %p399, %s26, 1
        %p401 = scmp.lt.s32.totalorder %s398, 1
        %s402 = scalar_select %p401, %s398, 1
        %s403 = smul.addr %s400, 2
        %s404 = sadd.s32 %s402, %s403
        %s405 = smul.addr %s404, 8
        %s406 = scalar_lea.vmem %s1, %s405
        %s407 = smul.u32 2, %s27
      $region56: #{tpu_custom_call.1} parent=47 // pred_fallthru
        _
    $region48: #{tpu_custom_call.1} parent=5 // pred_fallthru
      _
    %p408 = scmp.le.s32.totalorder 1, %s19
    %p409 = scmp.lt.s32.totalorder %s19, 3
    %p410 = pnand %p408, %p409
    %p411 = pneg %p410
    // Predicated region
    $region57: #{tpu_custom_call.1} parent=5 // pred_check
      _
    $region58: #{tpu_custom_call.1} parent=5 // pred_check_branch
      %413 = sbr.rel (%p410) target = $region60
    $region59: #{tpu_custom_call.1} parent=5 // pred_region
      %s414 = ssub.s32 %s19, 1
      %s415 = smul.u32 2, %s29
      %p416 = scmp.lt.s32.totalorder %s28, 1
      %s417 = scalar_select %p416, %s28, 1
      %p418 = scmp.lt.s32.totalorder %s415, 1
      %s419 = scalar_select %p418, %s415, 1
      %s420 = smul.addr %s417, 2
      %s421 = sadd.s32 %s419, %s420
      %s422 = smul.addr %s421, 8
      %s423 = scalar_lea.vmem %s0, %s422
      %p424 = pneg %p59
      %p425 = pneg %p56
      %s426 = smul.u32 2, %s29
      %p427 = scmp.lt.s32.totalorder %s28, 1
      %s428 = scalar_select %p427, %s28, 1
      %p429 = scmp.lt.s32.totalorder %s426, 1
      %s430 = scalar_select %p429, %s426, 1
      %s431 = smul.addr %s428, 2
      %s432 = sadd.s32 %s430, %s431
      %s433 = smul.addr %s432, 8
      %s434 = scalar_lea.vmem %s1, %s433
      %p435 = pneg %p87
      %p436 = pneg %p84
      %p437 = pneg %p108
      %p438 = pneg %p105
      %p439 = pneg %p129
      %p440 = pneg %p126
      %p441 = pneg %p150
      %p442 = pneg %p147
      %p443 = pneg %p171
      %p444 = pneg %p168
      %p445 = pneg %p192
      %p446 = pneg %p189
      %p447 = pneg %p213
      %p448 = pneg %p210
      %p449 = pneg %p234
      %p450 = pneg %p231
      %p451 = pneg %p255
      %p452 = pneg %p252
      %p453 = pneg %p283
      %p454 = pneg %p280
      %s455 = smul.u32 2, %s29
      %p456 = scmp.lt.s32.totalorder %s28, 1
      %s457 = scalar_select %p456, %s28, 1
      %p458 = scmp.lt.s32.totalorder %s455, 1
      %s459 = scalar_select %p458, %s455, 1
      %s460 = smul.addr %s457, 8
      %s461 = sadd.s32 %s459, %s460
      %s462 = smul.addr %s461, 8
      %s463 = scalar_lea.vmem %s10, %s462
      %p464 = pneg %p311
      %p465 = pneg %p308
      %s466 = smul.u32 2, %s29
      %p467 = scmp.lt.s32.totalorder %s28, 1
      %s468 = scalar_select %p467, %s28, 1
      %p469 = scmp.lt.s32.totalorder %s466, 1
      %s470 = scalar_select %p469, %s466, 1
      %s471 = smul.addr %s468, 8
      %s472 = sadd.s32 %s470, %s471
      %s473 = smul.addr %s472, 8
      %s474 = scalar_lea.vmem %s11, %s473
      %p475 = pneg %p339
      %p476 = pneg %p336
      %s477 = smul.u32 2, %s29
      %p478 = scmp.lt.s32.totalorder %s28, 1
      %s479 = scalar_select %p478, %s28, 1
      %p480 = scmp.lt.s32.totalorder %s477, 1
      %s481 = scalar_select %p480, %s477, 1
      %s482 = smul.addr %s479, 8
      %s483 = sadd.s32 %s481, %s482
      %s484 = smul.addr %s483, 8
      %s485 = scalar_lea.vmem %s12, %s484
      %s486 = smul.u32 2, %s29
      %p487 = scmp.lt.s32.totalorder %s28, 1
      %s488 = scalar_select %p487, %s28, 1
      %p489 = scmp.lt.s32.totalorder %s486, 1
      %s490 = scalar_select %p489, %s486, 1
      %s491 = smul.addr %s488, 2
      %s492 = sadd.s32 %s490, %s491
      %s493 = smul.addr %s492, 8
      %s494 = scalar_lea.vmem %s0, %s493
      %s495 = smul.u32 2, %s29
      %s496 = smul.u32 2, %s29
      %p497 = scmp.lt.s32.totalorder %s28, 1
      %s498 = scalar_select %p497, %s28, 1
      %p499 = scmp.lt.s32.totalorder %s496, 1
      %s500 = scalar_select %p499, %s496, 1
      %s501 = smul.addr %s498, 2
      %s502 = sadd.s32 %s500, %s501
      %s503 = smul.addr %s502, 8
      %s504 = scalar_lea.vmem %s1, %s503
      %s505 = smul.u32 2, %s29
      %s506 = smul.u32 2, %s29
      %p507 = scmp.lt.s32.totalorder %s28, 1
      %s508 = scalar_select %p507, %s28, 1
      %p509 = scmp.lt.s32.totalorder %s506, 1
      %s510 = scalar_select %p509, %s506, 1
      %s511 = smul.addr %s508, 8
      %s512 = sadd.s32 %s510, %s511
      %s513 = smul.addr %s512, 8
      %s514 = scalar_lea.vmem %s10, %s513
      %s515 = smul.u32 2, %s29
      %s516 = smul.u32 2, %s29
      %p517 = scmp.lt.s32.totalorder %s28, 1
      %s518 = scalar_select %p517, %s28, 1
      %p519 = scmp.lt.s32.totalorder %s516, 1
      %s520 = scalar_select %p519, %s516, 1
      %s521 = smul.addr %s518, 8
      %s522 = sadd.s32 %s520, %s521
      %s523 = smul.addr %s522, 8
      %s524 = scalar_lea.vmem %s11, %s523
      %s525 = smul.u32 2, %s29
      %s526 = smul.u32 2, %s29
      %p527 = scmp.lt.s32.totalorder %s28, 1
      %s528 = scalar_select %p527, %s28, 1
      %p529 = scmp.lt.s32.totalorder %s526, 1
      %s530 = scalar_select %p529, %s526, 1
      %s531 = smul.addr %s528, 8
      %s532 = sadd.s32 %s530, %s531
      %s533 = smul.addr %s532, 8
      %s534 = scalar_lea.vmem %s12, %s533
      %s535 = smul.u32 2, %s29
      %v536 = vld [vmem:[%s494] sm:$0xff]
      %v537 = vld [vmem:[%s494 + $0x8] sm:$0xff]
      %v538 = vld [vmem:[%s504] sm:$0xff]
      %v539 = vld [vmem:[%s504 + $0x8] sm:$0xff]
      %v540 = vadd.f32 %v536, %v538
      %v541 = vadd.f32 %v537, %v539
      %v542 = vld [vmem:[%s2] sm:$0xff]
      %v543 = vld [vmem:[%s2 + $0x8] sm:$0xff]
      %v544 = vld [vmem:[%s2 + $0x10] sm:$0xff]
      %v545 = vld [vmem:[%s2 + $0x18] sm:$0xff]
      %v546 = vld [vmem:[%s3] sm:$0x1]
      %v548 = vperm.slane %v546, 0
      %vm550 = vcmask 261120
      %v552 = vsel %vm550, %v540, 0
      %v555 = vsel %vm550, %v541, 0
      %557 = vmatpush.msra.mxu0 0.0
      %558 = vmatpush.msra.mxu0 0.0
      %559 = vmatpush.msra.mxu0 0.0
      %560 = vmatpush.msra.mxu0 0.0
      %561 = vmatpush.msra.mxu0 0.0
      %562 = vmatpush.msra.mxu0 0.0
      %563 = vmatpush.msra.mxu0 0.0
      %564 = vmatpush.msra.mxu0 0.0
      %565 = vmatpush.msra.mxu0 0.0
      %566 = vmatpush.msra.mxu0 0.0
      %567 = vmatpush.msra.mxu0 0.0
      %568 = vmatpush.msra.mxu0 0.0
      %569 = vmatpush.msra.mxu0 %v545
      %570 = vmatpush.msra.mxu0 %v544
      %571 = vmatpush.msra.mxu0 %v543
      %572 = vmatpush.msra.mxu0 %v542
      %573 = vmatmul.f32.gmra.mxu0 %v552
      %v574 = vpop.f32.mrf.mxu0
      %v575 = vadd.f32 %v548, %v574
      %576 = vmatmul.f32.gmra.mxu0 %v555
      %v577 = vpop.f32.mrf.mxu0
      %v578 = vadd.f32 %v548, %v577
      %579 = vdwg.mxu0
      %v580 = vadd.f32 %v575, %v536
      %v581 = vadd.f32 %v578, %v537
      %v582 = vld [vmem:[%s4] sm:$0xff]
      %v583 = vld [vmem:[%s4 + $0x8] sm:$0xff]
      %v584 = vld [vmem:[%s4 + $0x10] sm:$0xff]
      %v585 = vld [vmem:[%s4 + $0x18] sm:$0xff]
      %v586 = vld [vmem:[%s5] sm:$0x1]
      %v588 = vperm.slane %v586, 0
      %v591 = vsel %vm550, %v580, 0
      %v594 = vsel %vm550, %v581, 0
      %596 = vmatpush.msra.mxu0 0.0
      %597 = vmatpush.msra.mxu0 0.0
      %598 = vmatpush.msra.mxu0 0.0
      %599 = vmatpush.msra.mxu0 0.0
      %600 = vmatpush.msra.mxu0 0.0
      %601 = vmatpush.msra.mxu0 0.0
      %602 = vmatpush.msra.mxu0 0.0
      %603 = vmatpush.msra.mxu0 0.0
      %604 = vmatpush.msra.mxu0 0.0
      %605 = vmatpush.msra.mxu0 0.0
      %606 = vmatpush.msra.mxu0 0.0
      %607 = vmatpush.msra.mxu0 0.0
      %608 = vmatpush.msra.mxu0 %v585
      %609 = vmatpush.msra.mxu0 %v584
      %610 = vmatpush.msra.mxu0 %v583
      %611 = vmatpush.msra.mxu0 %v582
      %612 = vmatmul.f32.gmra.mxu0 %v591
      %v613 = vpop.f32.mrf.mxu0
      %v614 = vadd.f32 %v588, %v613
      %615 = vmatmul.f32.gmra.mxu0 %v594
      %v616 = vpop.f32.mrf.mxu0
      %v617 = vadd.f32 %v588, %v616
      %618 = vdwg.mxu0
      %vm619 = vcmask 64512
      %620 = vst.msk [vmem:[%s514] sm:$0xff] %vm619, %v614
      %621 = vst.msk [vmem:[%s514 + $0x8] sm:$0xff] %vm619, %v617
      %v622 = vld [vmem:[%s6] sm:$0xff]
      %v623 = vld [vmem:[%s6 + $0x8] sm:$0xff]
      %v624 = vld [vmem:[%s6 + $0x10] sm:$0xff]
      %v625 = vld [vmem:[%s6 + $0x18] sm:$0xff]
      %v626 = vld [vmem:[%s7] sm:$0x1]
      %v628 = vperm.slane %v626, 0
      %630 = vmatpush.msra.mxu0 0.0
      %631 = vmatpush.msra.mxu0 0.0
      %632 = vmatpush.msra.mxu0 0.0
      %633 = vmatpush.msra.mxu0 0.0
      %634 = vmatpush.msra.mxu0 0.0
      %635 = vmatpush.msra.mxu0 0.0
      %636 = vmatpush.msra.mxu0 0.0
      %637 = vmatpush.msra.mxu0 0.0
      %638 = vmatpush.msra.mxu0 0.0
      %639 = vmatpush.msra.mxu0 0.0
      %640 = vmatpush.msra.mxu0 0.0
      %641 = vmatpush.msra.mxu0 0.0
      %642 = vmatpush.msra.mxu0 %v625
      %643 = vmatpush.msra.mxu0 %v624
      %644 = vmatpush.msra.mxu0 %v623
      %645 = vmatpush.msra.mxu0 %v622
      %646 = vmatmul.f32.gmra.mxu0 %v591
      %v647 = vpop.f32.mrf.mxu0
      %v648 = vadd.f32 %v628, %v647
      %649 = vmatmul.f32.gmra.mxu0 %v594
      %v650 = vpop.f32.mrf.mxu0
      %v651 = vadd.f32 %v628, %v650
      %652 = vdwg.mxu0
      %653 = vst.msk [vmem:[%s524] sm:$0xff] %vm619, %v648
      %654 = vst.msk [vmem:[%s524 + $0x8] sm:$0xff] %vm619, %v651
      %v655 = vld [vmem:[%s8] sm:$0xff]
      %v656 = vld [vmem:[%s8 + $0x8] sm:$0xff]
      %v657 = vld [vmem:[%s8 + $0x10] sm:$0xff]
      %v658 = vld [vmem:[%s8 + $0x18] sm:$0xff]
      %v659 = vld [vmem:[%s9] sm:$0x1]
      %v661 = vperm.slane %v659, 0
      %663 = vmatpush.msra.mxu0 0.0
      %664 = vmatpush.msra.mxu0 0.0
      %665 = vmatpush.msra.mxu0 0.0
      %666 = vmatpush.msra.mxu0 0.0
      %667 = vmatpush.msra.mxu0 0.0
      %668 = vmatpush.msra.mxu0 0.0
      %669 = vmatpush.msra.mxu0 0.0
      %670 = vmatpush.msra.mxu0 0.0
      %671 = vmatpush.msra.mxu0 0.0
      %672 = vmatpush.msra.mxu0 0.0
      %673 = vmatpush.msra.mxu0 0.0
      %674 = vmatpush.msra.mxu0 0.0
      %675 = vmatpush.msra.mxu0 %v658
      %676 = vmatpush.msra.mxu0 %v657
      %677 = vmatpush.msra.mxu0 %v656
      %678 = vmatpush.msra.mxu0 %v655
      %679 = vmatmul.f32.gmra.mxu0 %v591
      %v680 = vpop.f32.mrf.mxu0
      %v681 = vadd.f32 %v661, %v680
      %682 = vmatmul.f32.gmra.mxu0 %v594
      %v683 = vpop.f32.mrf.mxu0
      %v684 = vadd.f32 %v661, %v683
      %685 = vdwg.mxu0
      %686 = vst.msk [vmem:[%s534] sm:$0xff] %vm619, %v681
      %687 = vst.msk [vmem:[%s534 + $0x8] sm:$0xff] %vm619, %v684
      %s688 = scalar_lea.vmem %s4, 32
      %v689 = vld [vmem:[%s688] sm:$0xff]
      %v690 = vld [vmem:[%s688 + $0x8] sm:$0xff]
      %v691 = vld [vmem:[%s688 + $0x10] sm:$0xff]
      %v692 = vld [vmem:[%s688 + $0x18] sm:$0xff]
      %s693 = scalar_lea.vmem %s5, 1
      %v694 = vld [vmem:[%s693] sm:$0x1]
      %v696 = vperm.slane %v694, 0
      %698 = vmatpush.msra.mxu0 0.0
      %699 = vmatpush.msra.mxu0 0.0
      %700 = vmatpush.msra.mxu0 0.0
      %701 = vmatpush.msra.mxu0 0.0
      %702 = vmatpush.msra.mxu0 0.0
      %703 = vmatpush.msra.mxu0 0.0
      %704 = vmatpush.msra.mxu0 0.0
      %705 = vmatpush.msra.mxu0 0.0
      %706 = vmatpush.msra.mxu0 0.0
      %707 = vmatpush.msra.mxu0 0.0
      %708 = vmatpush.msra.mxu0 0.0
      %709 = vmatpush.msra.mxu0 0.0
      %710 = vmatpush.msra.mxu0 %v692
      %711 = vmatpush.msra.mxu0 %v691
      %712 = vmatpush.msra.mxu0 %v690
      %713 = vmatpush.msra.mxu0 %v689
      %714 = vmatmul.f32.gmra.mxu0 %v591
      %v715 = vpop.f32.mrf.mxu0
      %v716 = vadd.f32 %v696, %v715
      %717 = vmatmul.f32.gmra.mxu0 %v594
      %v718 = vpop.f32.mrf.mxu0
      %v719 = vadd.f32 %v696, %v718
      %720 = vdwg.mxu0
      %s721 = scalar_lea.vmem %s514, 16
      %722 = vst.msk [vmem:[%s721] sm:$0xff] %vm619, %v716
      %723 = vst.msk [vmem:[%s721 + $0x8] sm:$0xff] %vm619, %v719
      %s724 = scalar_lea.vmem %s6, 32
      %v725 = vld [vmem:[%s724] sm:$0xff]
      %v726 = vld [vmem:[%s724 + $0x8] sm:$0xff]
      %v727 = vld [vmem:[%s724 + $0x10] sm:$0xff]
      %v728 = vld [vmem:[%s724 + $0x18] sm:$0xff]
      %s729 = scalar_lea.vmem %s7, 1
      %v730 = vld [vmem:[%s729] sm:$0x1]
      %v732 = vperm.slane %v730, 0
      %734 = vmatpush.msra.mxu0 0.0
      %735 = vmatpush.msra.mxu0 0.0
      %736 = vmatpush.msra.mxu0 0.0
      %737 = vmatpush.msra.mxu0 0.0
      %738 = vmatpush.msra.mxu0 0.0
      %739 = vmatpush.msra.mxu0 0.0
      %740 = vmatpush.msra.mxu0 0.0
      %741 = vmatpush.msra.mxu0 0.0
      %742 = vmatpush.msra.mxu0 0.0
      %743 = vmatpush.msra.mxu0 0.0
      %744 = vmatpush.msra.mxu0 0.0
      %745 = vmatpush.msra.mxu0 0.0
      %746 = vmatpush.msra.mxu0 %v728
      %747 = vmatpush.msra.mxu0 %v727
      %748 = vmatpush.msra.mxu0 %v726
      %749 = vmatpush.msra.mxu0 %v725
      %750 = vmatmul.f32.gmra.mxu0 %v591
      %v751 = vpop.f32.mrf.mxu0
      %v752 = vadd.f32 %v732, %v751
      %753 = vmatmul.f32.gmra.mxu0 %v594
      %v754 = vpop.f32.mrf.mxu0
      %v755 = vadd.f32 %v732, %v754
      %756 = vdwg.mxu0
      %s757 = scalar_lea.vmem %s524, 16
      %758 = vst.msk [vmem:[%s757] sm:$0xff] %vm619, %v752
      %759 = vst.msk [vmem:[%s757 + $0x8] sm:$0xff] %vm619, %v755
      %s760 = scalar_lea.vmem %s8, 32
      %v761 = vld [vmem:[%s760] sm:$0xff]
      %v762 = vld [vmem:[%s760 + $0x8] sm:$0xff]
      %v763 = vld [vmem:[%s760 + $0x10] sm:$0xff]
      %v764 = vld [vmem:[%s760 + $0x18] sm:$0xff]
      %s765 = scalar_lea.vmem %s9, 1
      %v766 = vld [vmem:[%s765] sm:$0x1]
      %v768 = vperm.slane %v766, 0
      %770 = vmatpush.msra.mxu0 0.0
      %771 = vmatpush.msra.mxu0 0.0
      %772 = vmatpush.msra.mxu0 0.0
      %773 = vmatpush.msra.mxu0 0.0
      %774 = vmatpush.msra.mxu0 0.0
      %775 = vmatpush.msra.mxu0 0.0
      %776 = vmatpush.msra.mxu0 0.0
      %777 = vmatpush.msra.mxu0 0.0
      %778 = vmatpush.msra.mxu0 0.0
      %779 = vmatpush.msra.mxu0 0.0
      %780 = vmatpush.msra.mxu0 0.0
      %781 = vmatpush.msra.mxu0 0.0
      %782 = vmatpush.msra.mxu0 %v764
      %783 = vmatpush.msra.mxu0 %v763
      %784 = vmatpush.msra.mxu0 %v762
      %785 = vmatpush.msra.mxu0 %v761
      %786 = vmatmul.f32.gmra.mxu0 %v591
      %v787 = vpop.f32.mrf.mxu0
      %v788 = vadd.f32 %v768, %v787
      %789 = vmatmul.f32.gmra.mxu0 %v594
      %v790 = vpop.f32.mrf.mxu0
      %v791 = vadd.f32 %v768, %v790
      %792 = vdwg.mxu0
      %s793 = scalar_lea.vmem %s534, 16
      %794 = vst.msk [vmem:[%s793] sm:$0xff] %vm619, %v788
      %795 = vst.msk [vmem:[%s793 + $0x8] sm:$0xff] %vm619, %v791
      %s796 = scalar_lea.vmem %s4, 64
      %v797 = vld [vmem:[%s796] sm:$0xff]
      %v798 = vld [vmem:[%s796 + $0x8] sm:$0xff]
      %v799 = vld [vmem:[%s796 + $0x10] sm:$0xff]
      %v800 = vld [vmem:[%s796 + $0x18] sm:$0xff]
      %s801 = scalar_lea.vmem %s5, 2
      %v802 = vld [vmem:[%s801] sm:$0x1]
      %v804 = vperm.slane %v802, 0
      %806 = vmatpush.msra.mxu0 0.0
      %807 = vmatpush.msra.mxu0 0.0
      %808 = vmatpush.msra.mxu0 0.0
      %809 = vmatpush.msra.mxu0 0.0
      %810 = vmatpush.msra.mxu0 0.0
      %811 = vmatpush.msra.mxu0 0.0
      %812 = vmatpush.msra.mxu0 0.0
      %813 = vmatpush.msra.mxu0 0.0
      %814 = vmatpush.msra.mxu0 0.0
      %815 = vmatpush.msra.mxu0 0.0
      %816 = vmatpush.msra.mxu0 0.0
      %817 = vmatpush.msra.mxu0 0.0
      %818 = vmatpush.msra.mxu0 %v800
      %819 = vmatpush.msra.mxu0 %v799
      %820 = vmatpush.msra.mxu0 %v798
      %821 = vmatpush.msra.mxu0 %v797
      %822 = vmatmul.f32.gmra.mxu0 %v591
      %v823 = vpop.f32.mrf.mxu0
      %v824 = vadd.f32 %v804, %v823
      %825 = vmatmul.f32.gmra.mxu0 %v594
      %v826 = vpop.f32.mrf.mxu0
      %v827 = vadd.f32 %v804, %v826
      %828 = vdwg.mxu0
      %s829 = scalar_lea.vmem %s514, 32
      %830 = vst.msk [vmem:[%s829] sm:$0xff] %vm619, %v824
      %831 = vst.msk [vmem:[%s829 + $0x8] sm:$0xff] %vm619, %v827
      %s832 = scalar_lea.vmem %s6, 64
      %v833 = vld [vmem:[%s832] sm:$0xff]
      %v834 = vld [vmem:[%s832 + $0x8] sm:$0xff]
      %v835 = vld [vmem:[%s832 + $0x10] sm:$0xff]
      %v836 = vld [vmem:[%s832 + $0x18] sm:$0xff]
      %s837 = scalar_lea.vmem %s7, 2
      %v838 = vld [vmem:[%s837] sm:$0x1]
      %v840 = vperm.slane %v838, 0
      %842 = vmatpush.msra.mxu0 0.0
      %843 = vmatpush.msra.mxu0 0.0
      %844 = vmatpush.msra.mxu0 0.0
      %845 = vmatpush.msra.mxu0 0.0
      %846 = vmatpush.msra.mxu0 0.0
      %847 = vmatpush.msra.mxu0 0.0
      %848 = vmatpush.msra.mxu0 0.0
      %849 = vmatpush.msra.mxu0 0.0
      %850 = vmatpush.msra.mxu0 0.0
      %851 = vmatpush.msra.mxu0 0.0
      %852 = vmatpush.msra.mxu0 0.0
      %853 = vmatpush.msra.mxu0 0.0
      %854 = vmatpush.msra.mxu0 %v836
      %855 = vmatpush.msra.mxu0 %v835
      %856 = vmatpush.msra.mxu0 %v834
      %857 = vmatpush.msra.mxu0 %v833
      %858 = vmatmul.f32.gmra.mxu0 %v591
      %v859 = vpop.f32.mrf.mxu0
      %v860 = vadd.f32 %v840, %v859
      %861 = vmatmul.f32.gmra.mxu0 %v594
      %v862 = vpop.f32.mrf.mxu0
      %v863 = vadd.f32 %v840, %v862
      %864 = vdwg.mxu0
      %s865 = scalar_lea.vmem %s524, 32
      %866 = vst.msk [vmem:[%s865] sm:$0xff] %vm619, %v860
      %867 = vst.msk [vmem:[%s865 + $0x8] sm:$0xff] %vm619, %v863
      %s868 = scalar_lea.vmem %s8, 64
      %v869 = vld [vmem:[%s868] sm:$0xff]
      %v870 = vld [vmem:[%s868 + $0x8] sm:$0xff]
      %v871 = vld [vmem:[%s868 + $0x10] sm:$0xff]
      %v872 = vld [vmem:[%s868 + $0x18] sm:$0xff]
      %s873 = scalar_lea.vmem %s9, 2
      %v874 = vld [vmem:[%s873] sm:$0x1]
      %v876 = vperm.slane %v874, 0
      %878 = vmatpush.msra.mxu0 0.0
      %879 = vmatpush.msra.mxu0 0.0
      %880 = vmatpush.msra.mxu0 0.0
      %881 = vmatpush.msra.mxu0 0.0
      %882 = vmatpush.msra.mxu0 0.0
      %883 = vmatpush.msra.mxu0 0.0
      %884 = vmatpush.msra.mxu0 0.0
      %885 = vmatpush.msra.mxu0 0.0
      %886 = vmatpush.msra.mxu0 0.0
      %887 = vmatpush.msra.mxu0 0.0
      %888 = vmatpush.msra.mxu0 0.0
      %889 = vmatpush.msra.mxu0 0.0
      %890 = vmatpush.msra.mxu0 %v872
      %891 = vmatpush.msra.mxu0 %v871
      %892 = vmatpush.msra.mxu0 %v870
      %893 = vmatpush.msra.mxu0 %v869
      %894 = vmatmul.f32.gmra.mxu0 %v591
      %v895 = vpop.f32.mrf.mxu0
      %v896 = vadd.f32 %v876, %v895
      %897 = vmatmul.f32.gmra.mxu0 %v594
      %v898 = vpop.f32.mrf.mxu0
      %v899 = vadd.f32 %v876, %v898
      %900 = vdwg.mxu0
      %s901 = scalar_lea.vmem %s534, 32
      %902 = vst.msk [vmem:[%s901] sm:$0xff] %vm619, %v896
      %903 = vst.msk [vmem:[%s901 + $0x8] sm:$0xff] %vm619, %v899
      %s904 = scalar_lea.vmem %s4, 96
      %v905 = vld [vmem:[%s904] sm:$0xff]
      %v906 = vld [vmem:[%s904 + $0x8] sm:$0xff]
      %v907 = vld [vmem:[%s904 + $0x10] sm:$0xff]
      %v908 = vld [vmem:[%s904 + $0x18] sm:$0xff]
      %s909 = scalar_lea.vmem %s5, 3
      %v910 = vld [vmem:[%s909] sm:$0x1]
      %v912 = vperm.slane %v910, 0
      %914 = vmatpush.msra.mxu0 0.0
      %915 = vmatpush.msra.mxu0 0.0
      %916 = vmatpush.msra.mxu0 0.0
      %917 = vmatpush.msra.mxu0 0.0
      %918 = vmatpush.msra.mxu0 0.0
      %919 = vmatpush.msra.mxu0 0.0
      %920 = vmatpush.msra.mxu0 0.0
      %921 = vmatpush.msra.mxu0 0.0
      %922 = vmatpush.msra.mxu0 0.0
      %923 = vmatpush.msra.mxu0 0.0
      %924 = vmatpush.msra.mxu0 0.0
      %925 = vmatpush.msra.mxu0 0.0
      %926 = vmatpush.msra.mxu0 %v908
      %927 = vmatpush.msra.mxu0 %v907
      %928 = vmatpush.msra.mxu0 %v906
      %929 = vmatpush.msra.mxu0 %v905
      %930 = vmatmul.f32.gmra.mxu0 %v591
      %v931 = vpop.f32.mrf.mxu0
      %v932 = vadd.f32 %v912, %v931
      %933 = vmatmul.f32.gmra.mxu0 %v594
      %v934 = vpop.f32.mrf.mxu0
      %v935 = vadd.f32 %v912, %v934
      %936 = vdwg.mxu0
      %s937 = scalar_lea.vmem %s514, 48
      %938 = vst.msk [vmem:[%s937] sm:$0xff] %vm619, %v932
      %939 = vst.msk [vmem:[%s937 + $0x8] sm:$0xff] %vm619, %v935
      %s940 = scalar_lea.vmem %s6, 96
      %v941 = vld [vmem:[%s940] sm:$0xff]
      %v942 = vld [vmem:[%s940 + $0x8] sm:$0xff]
      %v943 = vld [vmem:[%s940 + $0x10] sm:$0xff]
      %v944 = vld [vmem:[%s940 + $0x18] sm:$0xff]
      %s945 = scalar_lea.vmem %s7, 3
      %v946 = vld [vmem:[%s945] sm:$0x1]
      %v948 = vperm.slane %v946, 0
      %950 = vmatpush.msra.mxu0 0.0
      %951 = vmatpush.msra.mxu0 0.0
      %952 = vmatpush.msra.mxu0 0.0
      %953 = vmatpush.msra.mxu0 0.0
      %954 = vmatpush.msra.mxu0 0.0
      %955 = vmatpush.msra.mxu0 0.0
      %956 = vmatpush.msra.mxu0 0.0
      %957 = vmatpush.msra.mxu0 0.0
      %958 = vmatpush.msra.mxu0 0.0
      %959 = vmatpush.msra.mxu0 0.0
      %960 = vmatpush.msra.mxu0 0.0
      %961 = vmatpush.msra.mxu0 0.0
      %962 = vmatpush.msra.mxu0 %v944
      %963 = vmatpush.msra.mxu0 %v943
      %964 = vmatpush.msra.mxu0 %v942
      %965 = vmatpush.msra.mxu0 %v941
      %966 = vmatmul.f32.gmra.mxu0 %v591
      %v967 = vpop.f32.mrf.mxu0
      %v968 = vadd.f32 %v948, %v967
      %969 = vmatmul.f32.gmra.mxu0 %v594
      %v970 = vpop.f32.mrf.mxu0
      %v971 = vadd.f32 %v948, %v970
      %972 = vdwg.mxu0
      %s973 = scalar_lea.vmem %s524, 48
      %974 = vst.msk [vmem:[%s973] sm:$0xff] %vm619, %v968
      %975 = vst.msk [vmem:[%s973 + $0x8] sm:$0xff] %vm619, %v971
      %s976 = scalar_lea.vmem %s8, 96
      %v977 = vld [vmem:[%s976] sm:$0xff]
      %v978 = vld [vmem:[%s976 + $0x8] sm:$0xff]
      %v979 = vld [vmem:[%s976 + $0x10] sm:$0xff]
      %v980 = vld [vmem:[%s976 + $0x18] sm:$0xff]
      %s981 = scalar_lea.vmem %s9, 3
      %v982 = vld [vmem:[%s981] sm:$0x1]
      %v984 = vperm.slane %v982, 0
      %986 = vmatpush.msra.mxu0 0.0
      %987 = vmatpush.msra.mxu0 0.0
      %988 = vmatpush.msra.mxu0 0.0
      %989 = vmatpush.msra.mxu0 0.0
      %990 = vmatpush.msra.mxu0 0.0
      %991 = vmatpush.msra.mxu0 0.0
      %992 = vmatpush.msra.mxu0 0.0
      %993 = vmatpush.msra.mxu0 0.0
      %994 = vmatpush.msra.mxu0 0.0
      %995 = vmatpush.msra.mxu0 0.0
      %996 = vmatpush.msra.mxu0 0.0
      %997 = vmatpush.msra.mxu0 0.0
      %998 = vmatpush.msra.mxu0 %v980
      %999 = vmatpush.msra.mxu0 %v979
      %1000 = vmatpush.msra.mxu0 %v978
      %1001 = vmatpush.msra.mxu0 %v977
      %1002 = vmatmul.f32.gmra.mxu0 %v591
      %v1003 = vpop.f32.mrf.mxu0
      %v1004 = vadd.f32 %v984, %v1003
      %1005 = vmatmul.f32.gmra.mxu0 %v594
      %v1006 = vpop.f32.mrf.mxu0
      %v1007 = vadd.f32 %v984, %v1006
      %1008 = vdwg.mxu0
      %s1009 = scalar_lea.vmem %s534, 48
      %1010 = vst.msk [vmem:[%s1009] sm:$0xff] %vm619, %v1004
      %1011 = vst.msk [vmem:[%s1009 + $0x8] sm:$0xff] %vm619, %v1007
      %s1012 = smul.u32 2, %s29
      %p1013 = scmp.lt.s32.totalorder %s28, 1
      %s1014 = scalar_select %p1013, %s28, 1
      %p1015 = scmp.lt.s32.totalorder %s1012, 1
      %s1016 = scalar_select %p1015, %s1012, 1
      %s1017 = smul.addr %s1014, 8
      %s1018 = sadd.s32 %s1016, %s1017
      %s1019 = smul.addr %s1018, 8
      %s1020 = scalar_lea.vmem %s10, %s1019
      %s1021 = smul.u32 2, %s29
      %p1022 = scmp.lt.s32.totalorder %s28, 1
      %s1023 = scalar_select %p1022, %s28, 1
      %p1024 = scmp.lt.s32.totalorder %s1021, 1
      %s1025 = scalar_select %p1024, %s1021, 1
      %s1026 = smul.addr %s1023, 8
      %s1027 = sadd.s32 %s1025, %s1026
      %s1028 = smul.addr %s1027, 8
      %s1029 = scalar_lea.vmem %s11, %s1028
      %s1030 = smul.u32 2, %s29
      %p1031 = scmp.lt.s32.totalorder %s28, 1
      %s1032 = scalar_select %p1031, %s28, 1
      %p1033 = scmp.lt.s32.totalorder %s1030, 1
      %s1034 = scalar_select %p1033, %s1030, 1
      %s1035 = smul.addr %s1032, 8
      %s1036 = sadd.s32 %s1034, %s1035
      %s1037 = smul.addr %s1036, 8
      %s1038 = scalar_lea.vmem %s12, %s1037
      // Predicated region
      $region61: #{tpu_custom_call.1} parent=59 // pred_check
        %p1039 = pneg %p280
      $region62: #{tpu_custom_call.1} parent=59 // pred_check_branch
        %1041 = sbr.rel (%p1039) target = $region64
      $region63: #{tpu_custom_call.1} parent=59 // pred_region
        %s1042 = smul.u32 2, %s29
      $region64: #{tpu_custom_call.1} parent=59 // pred_fallthru
        _
      // Predicated region
      $region65: #{tpu_custom_call.1} parent=59 // pred_check
        %p1043 = pneg %p308
      $region66: #{tpu_custom_call.1} parent=59 // pred_check_branch
        %1045 = sbr.rel (%p1043) target = $region68
      $region67: #{tpu_custom_call.1} parent=59 // pred_region
        %s1046 = smul.u32 2, %s29
      $region68: #{tpu_custom_call.1} parent=59 // pred_fallthru
        _
      // Predicated region
      $region69: #{tpu_custom_call.1} parent=59 // pred_check
        %p1047 = pneg %p336
      $region70: #{tpu_custom_call.1} parent=59 // pred_check_branch
        %1049 = sbr.rel (%p1047) target = $region72
      $region71: #{tpu_custom_call.1} parent=59 // pred_region
        %s1050 = smul.u32 2, %s29
      $region72: #{tpu_custom_call.1} parent=59 // pred_fallthru
        _
    $region60: #{tpu_custom_call.1} parent=5 // pred_fallthru
      _
    %p1051 = scmp.le.s32.totalorder 2, %s19
    // Predicated region
    $region73: #{tpu_custom_call.1} parent=5 // pred_check
      %p1052 = pneg %p1051
    $region74: #{tpu_custom_call.1} parent=5 // pred_check_branch
      %1054 = sbr.rel (%p1052) target = $region76
    $region75: #{tpu_custom_call.1} parent=5 // pred_region
      %s1055 = ssub.s32 %s19, 2
      // Predicated region
      $region77: #{tpu_custom_call.1} parent=75 // pred_check
        %p1056 = pneg %p286
      $region78: #{tpu_custom_call.1} parent=75 // pred_check_branch
        %1058 = sbr.rel (%p1056) target = $region80
      $region79: #{tpu_custom_call.1} parent=75 // pred_region
        %s1059 = smul.u32 2, %s31
        %p1060 = scmp.lt.s32.totalorder %s30, 1
        %s1061 = scalar_select %p1060, %s30, 1
        %p1062 = scmp.lt.s32.totalorder %s1059, 1
        %s1063 = scalar_select %p1062, %s1059, 1
        %s1064 = smul.addr %s1061, 8
        %s1065 = sadd.s32 %s1063, %s1064
        %s1066 = smul.addr %s1065, 8
        %s1067 = scalar_lea.vmem %s10, %s1066
      $region80: #{tpu_custom_call.1} parent=75 // pred_fallthru
        _
      // Predicated region
      $region81: #{tpu_custom_call.1} parent=75 // pred_check
        %p1068 = pneg %p314
      $region82: #{tpu_custom_call.1} parent=75 // pred_check_branch
        %1070 = sbr.rel (%p1068) target = $region84
      $region83: #{tpu_custom_call.1} parent=75 // pred_region
        %s1071 = smul.u32 2, %s31
        %p1072 = scmp.lt.s32.totalorder %s30, 1
        %s1073 = scalar_select %p1072, %s30, 1
        %p1074 = scmp.lt.s32.totalorder %s1071, 1
        %s1075 = scalar_select %p1074, %s1071, 1
        %s1076 = smul.addr %s1073, 8
        %s1077 = sadd.s32 %s1075, %s1076
        %s1078 = smul.addr %s1077, 8
        %s1079 = scalar_lea.vmem %s11, %s1078
      $region84: #{tpu_custom_call.1} parent=75 // pred_fallthru
        _
      // Predicated region
      $region85: #{tpu_custom_call.1} parent=75 // pred_check
        %p1080 = pneg %p342
      $region86: #{tpu_custom_call.1} parent=75 // pred_check_branch
        %1082 = sbr.rel (%p1080) target = $region88
      $region87: #{tpu_custom_call.1} parent=75 // pred_region
        %s1083 = smul.u32 2, %s31
        %p1084 = scmp.lt.s32.totalorder %s30, 1
        %s1085 = scalar_select %p1084, %s30, 1
        %p1086 = scmp.lt.s32.totalorder %s1083, 1
        %s1087 = scalar_select %p1086, %s1083, 1
        %s1088 = smul.addr %s1085, 8
        %s1089 = sadd.s32 %s1087, %s1088
        %s1090 = smul.addr %s1089, 8
        %s1091 = scalar_lea.vmem %s12, %s1090
      $region88: #{tpu_custom_call.1} parent=75 // pred_fallthru
        _
    $region76: #{tpu_custom_call.1} parent=5 // pred_fallthru
      _
  $region6: #{tpu_custom_call.1} parent=0 // loop_footer
    %s23 = sadd.s32 1, %s19
  $region7: #{tpu_custom_call.1} parent=0 // loop_footer_branch
    %18 = sbr.rel target = $region3
  $region8: #{tpu_custom_call.1} parent=0 // loop_exit
    _

</llo_original>
